<compile_context>
chip_gen: v7x
topology: tpu7x:2x2x1
jax: 0.10.0
libtpu: 0.0.40
codegen_flags: <defaults>
</compile_context>

<pallas_src>
import numpy as np
import jax
import jax.numpy as jnp
from jax.experimental import pallas as pl
from jax.experimental.pallas import tpu as pltpu


def pr_score_kernel(src_idx_ref, dst_idx_ref,              # scalar prefetch (SMEM)
                    node_feat_ref, node_ts_ref,            # VMEM-resident node tables
                    time_w_ref, time_b_ref,                # TimeEncode params
                    wg_ref,                                # graph placeholder proj
                    wfc_text_ref, wfc_graph_ref, bfc_ref,  # compose fc (split weights)
                    w1_src_ref, w1_dst_ref, b1_ref,        # MergeLayer fc1 (split)
                    w2_ref, b2_ref,                        # MergeLayer fc2
                    score_ref,                             # out tile (TM, 1)
                    src_feat_sc, dst_feat_sc,              # VMEM scratch (TM, D)
                    src_ts_sc, dst_ts_sc):                 # VMEM scratch (TM, 1)
    i = pl.program_id(0)
    tm = score_ref.shape[0]

    # ---- fused row gather from the resident node tables (data movement only) ----
    for r in range(tm):                        # tm is a Python int -> unrolled
        row = i * tm + r
        si = src_idx_ref[row]                  # SMEM scalar reads (dynamic index)
        di = dst_idx_ref[row]
        src_feat_sc[pl.ds(r, 1), :] = node_feat_ref[pl.ds(si, 1), :]   # (1, D)
        dst_feat_sc[pl.ds(r, 1), :] = node_feat_ref[pl.ds(di, 1), :]   # (1, D)
        src_ts_sc[pl.ds(r, 1), :] = node_ts_ref[pl.ds(si, 1), :]       # (1, 1)
        dst_ts_sc[pl.ds(r, 1), :] = node_ts_ref[pl.ds(di, 1), :]       # (1, 1)

    # Hoisted broadcasts: TimeEncode params loaded once per tile.
    tw = time_w_ref[...]                       # (1, D)
    tb = time_b_ref[...]

    src_feat = src_feat_sc[...]                # (TM, D) f32
    dst_feat = dst_feat_sc[...]

    # compute_text_embedding: node_features[n] + cos(t * w + b), batched on tile
    src_text = src_feat + jnp.cos(src_ts_sc[...] * tw + tb)
    dst_text = dst_feat + jnp.cos(dst_ts_sc[...] * tw + tb)

    mxu_dt = wg_ref.dtype                      # bf16 on v6e/v7x, f32 otherwise

    def mm(a, w_ref):                          # MXU dot, f32 accumulation
        return jnp.dot(a.astype(mxu_dt), w_ref[...],
                       preferred_element_type=jnp.float32)

    # TODO(synk): MyTgn graph embedding (neighbor_finder + TGN memory/attention)
    # is an external module not defined in the reference; a deterministic
    # placeholder projection tanh(features @ Wg) is fused here instead.
    graph_emb = jnp.tanh(mm(dst_feat, wg_ref))

    # compose_text_graph_embedding: fc(concat([text, graph], dim=1)) as split matmul
    node_emb = (mm(dst_text, wfc_text_ref) + mm(graph_emb, wfc_graph_ref)
                + bfc_ref[...])

    # MergeLayer: fc2(relu(fc1(concat([src_emb, node_emb], dim=1))))
    h = jnp.maximum(mm(src_text, w1_src_ref) + mm(node_emb, w1_dst_ref)
                    + b1_ref[...], 0.0)

    # fc2 (Linear(D, 1)) as VPU multiply + lane reduction (no 1/128-lane MXU dot).
    logit = jnp.sum(h * w2_ref[...], axis=-1, keepdims=True) + b2_ref[...]
    score_ref[...] = jax.nn.sigmoid(logit)


def pr_scores(src_idx, dst_idx, node_features, node_timestamps, params, *, tile_m=8):
    """One fused pallas_call: gathers, TimeEncode, graph projection, compose-fc,
    MergeLayer and sigmoid, tiled over rows (TM per grid step)."""
    N = int(src_idx.shape[0])
    num_nodes, D = node_features.shape
    assert N % tile_m == 0, "pad the edge batch to a multiple of tile_m"
    assert D % 128 == 0 and num_nodes % 8 == 0
    num_tiles = N // tile_m

    src_idx = src_idx.astype(jnp.int32)
    dst_idx = dst_idx.astype(jnp.int32)
    node_ts = node_timestamps.reshape(num_nodes, 1).astype(jnp.float32)

    def resident(shape):   # whole-array block, stays in VMEM across the grid
        return pl.BlockSpec(shape, lambda i, *_: (0, 0),
                            memory_space=pltpu.MemorySpace.VMEM)

    grid_spec = pltpu.PrefetchScalarGridSpec(
        num_scalar_prefetch=2,                 # src_idx, dst_idx -> SMEM
        grid=(num_tiles,),
        in_specs=[
            resident((num_nodes, D)),          # node_features table
            resident((num_nodes, 1)),          # node_timestamps table
            resident((1, D)),                  # time_w
            resident((1, D)),                  # time_b
            resident((D, D)),                  # wg (graph placeholder)
            resident((D, D)),                  # wfc_text
            resident((D, D)),                  # wfc_graph
            resident((1, D)),                  # bfc
            resident((D, D)),                  # w1_src
            resident((D, D)),                  # w1_dst
            resident((1, D)),                  # b1
            resident((1, D)),                  # w2
            resident((1, 1)),                  # b2
        ],
        out_specs=pl.BlockSpec((tile_m, 1), lambda i, *_: (i, 0),
                               memory_space=pltpu.MemorySpace.VMEM),
        scratch_shapes=[pltpu.VMEM((tile_m, D), jnp.float32),
                        pltpu.VMEM((tile_m, D), jnp.float32),
                        pltpu.VMEM((tile_m, 1), jnp.float32),
                        pltpu.VMEM((tile_m, 1), jnp.float32)],
    )

    operands = (src_idx, dst_idx, node_features, node_ts,
                params['time_w'], params['time_b'], params['wg'],
                params['wfc_text'], params['wfc_graph'], params['bfc'],
                params['w1_src'], params['w1_dst'], params['b1'],
                params['w2'], params['b2'])

    cost = pl.CostEstimate(
        flops=int(8 * N * D * D + 8 * N * D),          # 4 [N,D]x[D,D] dots + reduce
        transcendentals=int(3 * N * D + N),            # cos x2, tanh, sigmoid
        bytes_accessed=int(sum(int(np.prod(a.shape)) * a.dtype.itemsize
                               for a in operands) + N * 4),
    )

    return pl.pallas_call(
        pr_score_kernel,
        out_shape=jax.ShapeDtypeStruct((N, 1), jnp.float32),
        grid_spec=grid_spec,
        compiler_params=pltpu.CompilerParams(
            dimension_semantics=("parallel",),         # megacore sharding on v7x
            vmem_limit_bytes=32 * 1024 * 1024,         # explicit budget (< 64 MiB v7x)
        ),
        cost_estimate=cost,
    )(*operands)


def init_params(key, D, mxu_dtype=jnp.float32):
    """Parameter init mirroring the module's __init__ shapes (weights stored
    pre-transposed to [in, out]; concat weights split into per-input halves)."""
    kg, kfc, kfcb, k1, k1b, k2, k2b = jax.random.split(key, 7)

    # TimeEncode: Linear(1, D) with fixed 1/10**linspace(0,9,D) weights, zero bias
    time_w = (1.0 / 10 ** np.linspace(0, 9, D)).astype(np.float32).reshape(1, D)
    time_b = np.zeros((1, D), np.float32)

    # TODO(synk): placeholder weight for the external MyTgn graph embedding.
    Wg = jax.random.normal(kg, (D, D), jnp.float32) / np.sqrt(D)

    # self.fc = Linear(2D, D), xavier_normal_ weight   (torch weight: [out, in])
    std = float(np.sqrt(2.0 / (2 * D + D)))
    Wfc = std * jax.random.normal(kfc, (D, 2 * D), jnp.float32)
    bfc = 0.01 * jax.random.normal(kfcb, (1, D), jnp.float32)

    # affinity_score = MergeLayer(D, D, D, 1): fc1 = Linear(2D, D), fc2 = Linear(D, 1)
    W1 = jax.random.normal(k1, (D, 2 * D), jnp.float32) / np.sqrt(2 * D)
    b1 = 0.01 * jax.random.normal(k1b, (1, D), jnp.float32)
    W2 = jax.random.normal(k2, (1, D), jnp.float32) / np.sqrt(D)
    b2 = 0.01 * jax.random.normal(k2b, (1, 1), jnp.float32)

    # MXU-facing weights in the MXU dtype (bf16 on v6e/v7x -> half the weight
    # DMA bytes, 2x MXU rate once compute-bound).  VPU/EUP-facing params stay f32.
    c = lambda w: jnp.asarray(w, mxu_dtype)
    return dict(
        time_w=jnp.asarray(time_w), time_b=jnp.asarray(time_b),
        wg=c(Wg),
        wfc_text=c(Wfc[:, :D].T), wfc_graph=c(Wfc[:, D:].T), bfc=bfc,
        w1_src=c(W1[:, :D].T), w1_dst=c(W1[:, D:].T), b1=b1,
        w2=W2, b2=b2,
    )


if __name__ == "__main__":
    key = jax.random.PRNGKey(0)
    D = 128          # node_feature_dim (= text/graph feature dim)
    B = 8            # edge batch size; kernel scores 2B rows (pos ++ neg)
    NUM_NODES = 32
    TILE_M = 8       # rows per grid step (f32 sublane-aligned)

    # bf16 MXU operands on v6e/v7x; keep f32 on v5e and everything else.
    kind = jax.devices()[0].device_kind.lower()
    use_bf16_mxu = any(t in kind for t in ("v6", "v7", "7x"))
    mxu_dtype = jnp.bfloat16 if use_bf16_mxu else jnp.float32

    k_feat, k_ts, k_nodes, k_params = jax.random.split(key, 4)
    node_features = jax.random.normal(k_feat, (NUM_NODES, D), jnp.float32)
    node_timestamps = jax.random.uniform(k_ts, (NUM_NODES,), jnp.float32, 0.0, 100.0)
    params = init_params(k_params, D, mxu_dtype)

    src_nodes = jax.random.randint(k_nodes, (B,), 0, NUM_NODES, dtype=jnp.int32)
    dst_nodes = (src_nodes + 1) % NUM_NODES
    neg_nodes = (src_nodes + 7) % NUM_NODES

    # compute_edge_probabilities glue: only the index lists are built outside;
    # all gathers / projections happen inside the fused kernel.
    nodes = jnp.concatenate([dst_nodes, neg_nodes])      # dst ++ neg   -> 2B rows
    src_dup = jnp.concatenate([src_nodes, src_nodes])    # src repeated -> 2B rows

    scores = jax.block_until_ready(
        pr_scores(src_dup, nodes, node_features, node_timestamps, params,
                  tile_m=TILE_M))
    pos_score, neg_score = scores[:B, 0], scores[B:, 0]  # sigmoid'd, as in forward

    # ---- pure-JAX reference (mirrors the kernel math incl. the MXU dtype) ----
    def ref():
        sf = node_features[src_dup]
        df = node_features[nodes]
        st = node_timestamps[src_dup][:, None]
        dt = node_timestamps[nodes][:, None]
        te = lambda t: jnp.cos(t * params['time_w'] + params['time_b'])
        src_text = sf + te(st)
        dst_text = df + te(dt)
        mm = lambda a, w: jnp.dot(a.astype(w.dtype), w,
                                  preferred_element_type=jnp.float32)
        graph = jnp.tanh(mm(df, params['wg']))
        node_emb = (mm(dst_text, params['wfc_text'])
                    + mm(graph, params['wfc_graph']) + params['bfc'])
        h = jnp.maximum(mm(src_text, params['w1_src'])
                        + mm(node_emb, params['w1_dst']) + params['b1'], 0.0)
        logit = jnp.sum(h * params['w2'], axis=-1, keepdims=True) + params['b2']
        return jax.nn.sigmoid(logit)

    assert scores.shape == (2 * B, 1)
    assert pos_score.shape == (B,) and neg_score.shape == (B,)
    tol = 2e-3 if use_bf16_mxu else 1e-4
    assert np.allclose(np.asarray(scores), np.asarray(ref()), atol=tol), "mismatch"
    print("KERNEL_OK")
</pallas_src>

<mosaic_0001>
module attributes {stable_mosaic.version = 11 : i64} {
  func.func @pr_score_kernel(%arg0: i32, %arg1: memref<16xi32, #tpu.memory_space<smem>>, %arg2: memref<16xi32, #tpu.memory_space<smem>>, %arg3: memref<32x128xf32, #tpu.memory_space<vmem>>, %arg4: memref<32x1xf32, #tpu.memory_space<vmem>>, %arg5: memref<1x128xf32, #tpu.memory_space<vmem>>, %arg6: memref<1x128xf32, #tpu.memory_space<vmem>>, %arg7: memref<128x128xf32, #tpu.memory_space<vmem>>, %arg8: memref<128x128xf32, #tpu.memory_space<vmem>>, %arg9: memref<128x128xf32, #tpu.memory_space<vmem>>, %arg10: memref<1x128xf32, #tpu.memory_space<vmem>>, %arg11: memref<128x128xf32, #tpu.memory_space<vmem>>, %arg12: memref<128x128xf32, #tpu.memory_space<vmem>>, %arg13: memref<1x128xf32, #tpu.memory_space<vmem>>, %arg14: memref<1x128xf32, #tpu.memory_space<vmem>>, %arg15: memref<1x1xf32, #tpu.memory_space<vmem>>, %arg16: memref<8x1xf32, #tpu.memory_space<vmem>>, %arg17: memref<8x128xf32, #tpu.memory_space<vmem>>, %arg18: memref<8x128xf32, #tpu.memory_space<vmem>>, %arg19: memref<8x1xf32, #tpu.memory_space<vmem>>, %arg20: memref<8x1xf32, #tpu.memory_space<vmem>>) attributes {dimension_semantics = [#tpu.dimension_semantics<parallel>], iteration_bounds = array<i64: 2>, scalar_prefetch = 2 : i64, scratch_operands = 4 : i64, tpu.core_type = #tpu.core_type<tc>, window_params = [{pipeline_mode = #tpu.pipeline_mode<synchronous>, transform_indices = @transform_0, window_bounds = array<i64: 32, 128>}, {pipeline_mode = #tpu.pipeline_mode<synchronous>, transform_indices = @transform_1, window_bounds = array<i64: 32, 1>}, {pipeline_mode = #tpu.pipeline_mode<synchronous>, transform_indices = @transform_2, window_bounds = array<i64: 1, 128>}, {pipeline_mode = #tpu.pipeline_mode<synchronous>, transform_indices = @transform_3, window_bounds = array<i64: 1, 128>}, {pipeline_mode = #tpu.pipeline_mode<synchronous>, transform_indices = @transform_4, window_bounds = array<i64: 128, 128>}, {pipeline_mode = #tpu.pipeline_mode<synchronous>, transform_indices = @transform_5, window_bounds = array<i64: 128, 128>}, {pipeline_mode = #tpu.pipeline_mode<synchronous>, transform_indices = @transform_6, window_bounds = array<i64: 128, 128>}, {pipeline_mode = #tpu.pipeline_mode<synchronous>, transform_indices = @transform_7, window_bounds = array<i64: 1, 128>}, {pipeline_mode = #tpu.pipeline_mode<synchronous>, transform_indices = @transform_8, window_bounds = array<i64: 128, 128>}, {pipeline_mode = #tpu.pipeline_mode<synchronous>, transform_indices = @transform_9, window_bounds = array<i64: 128, 128>}, {pipeline_mode = #tpu.pipeline_mode<synchronous>, transform_indices = @transform_10, window_bounds = array<i64: 1, 128>}, {pipeline_mode = #tpu.pipeline_mode<synchronous>, transform_indices = @transform_11, window_bounds = array<i64: 1, 128>}, {pipeline_mode = #tpu.pipeline_mode<synchronous>, transform_indices = @transform_12, window_bounds = array<i64: 1, 1>}, {transform_indices = @transform_13, window_bounds = array<i64: 8, 1>}]} {
    %c8_i32 = arith.constant 8 : i32
    %0 = arith.muli %arg0, %c8_i32 : i32
    %c0_i32 = arith.constant 0 : i32
    %1 = arith.addi %0, %c0_i32 : i32
    %2 = arith.index_cast %1 : i32 to index
    %3 = memref.load %arg1[%2] : memref<16xi32, #tpu.memory_space<smem>>
    %4 = arith.index_cast %1 : i32 to index
    %5 = memref.load %arg2[%4] : memref<16xi32, #tpu.memory_space<smem>>
    %6 = arith.index_cast %3 : i32 to index
    %c0 = arith.constant 0 : index
    %7 = vector.load %arg3[%6, %c0] : memref<32x128xf32, #tpu.memory_space<vmem>>, vector<1x128xf32>
    %c0_0 = arith.constant 0 : index
    %c0_1 = arith.constant 0 : index
    %8 = vector.load %arg17[%c0_0, %c0_1] : memref<8x128xf32, #tpu.memory_space<vmem>>, vector<1x128xf32>
    tpu.vector_store %arg17[%c0_0, %c0_1], %7 {strides = array<i32>} : memref<8x128xf32, #tpu.memory_space<vmem>>, vector<1x128xf32>,
    %9 = arith.index_cast %5 : i32 to index
    %c0_2 = arith.constant 0 : index
    %10 = vector.load %arg3[%9, %c0_2] : memref<32x128xf32, #tpu.memory_space<vmem>>, vector<1x128xf32>
    %c0_3 = arith.constant 0 : index
    %c0_4 = arith.constant 0 : index
    %11 = vector.load %arg18[%c0_3, %c0_4] : memref<8x128xf32, #tpu.memory_space<vmem>>, vector<1x128xf32>
    tpu.vector_store %arg18[%c0_3, %c0_4], %10 {strides = array<i32>} : memref<8x128xf32, #tpu.memory_space<vmem>>, vector<1x128xf32>,
    %12 = arith.index_cast %3 : i32 to index
    %c0_5 = arith.constant 0 : index
    %13 = vector.load %arg4[%12, %c0_5] : memref<32x1xf32, #tpu.memory_space<vmem>>, vector<1x1xf32>
    %c0_6 = arith.constant 0 : index
    %c0_7 = arith.constant 0 : index
    %14 = vector.load %arg19[%c0_6, %c0_7] : memref<8x1xf32, #tpu.memory_space<vmem>>, vector<1x1xf32>
    tpu.vector_store %arg19[%c0_6, %c0_7], %13 {strides = array<i32>} : memref<8x1xf32, #tpu.memory_space<vmem>>, vector<1x1xf32>,
    %15 = arith.index_cast %5 : i32 to index
    %c0_8 = arith.constant 0 : index
    %16 = vector.load %arg4[%15, %c0_8] : memref<32x1xf32, #tpu.memory_space<vmem>>, vector<1x1xf32>
    %c0_9 = arith.constant 0 : index
    %c0_10 = arith.constant 0 : index
    %17 = vector.load %arg20[%c0_9, %c0_10] : memref<8x1xf32, #tpu.memory_space<vmem>>, vector<1x1xf32>
    tpu.vector_store %arg20[%c0_9, %c0_10], %16 {strides = array<i32>} : memref<8x1xf32, #tpu.memory_space<vmem>>, vector<1x1xf32>,
    %c8_i32_11 = arith.constant 8 : i32
    %18 = arith.muli %arg0, %c8_i32_11 : i32
    %c1_i32 = arith.constant 1 : i32
    %19 = arith.addi %18, %c1_i32 : i32
    %20 = arith.index_cast %19 : i32 to index
    %21 = memref.load %arg1[%20] : memref<16xi32, #tpu.memory_space<smem>>
    %22 = arith.index_cast %19 : i32 to index
    %23 = memref.load %arg2[%22] : memref<16xi32, #tpu.memory_space<smem>>
    %24 = arith.index_cast %21 : i32 to index
    %c0_12 = arith.constant 0 : index
    %25 = vector.load %arg3[%24, %c0_12] : memref<32x128xf32, #tpu.memory_space<vmem>>, vector<1x128xf32>
    %c1 = arith.constant 1 : index
    %c0_13 = arith.constant 0 : index
    %26 = vector.load %arg17[%c1, %c0_13] : memref<8x128xf32, #tpu.memory_space<vmem>>, vector<1x128xf32>
    tpu.vector_store %arg17[%c1, %c0_13], %25 {strides = array<i32>} : memref<8x128xf32, #tpu.memory_space<vmem>>, vector<1x128xf32>,
    %27 = arith.index_cast %23 : i32 to index
    %c0_14 = arith.constant 0 : index
    %28 = vector.load %arg3[%27, %c0_14] : memref<32x128xf32, #tpu.memory_space<vmem>>, vector<1x128xf32>
    %c1_15 = arith.constant 1 : index
    %c0_16 = arith.constant 0 : index
    %29 = vector.load %arg18[%c1_15, %c0_16] : memref<8x128xf32, #tpu.memory_space<vmem>>, vector<1x128xf32>
    tpu.vector_store %arg18[%c1_15, %c0_16], %28 {strides = array<i32>} : memref<8x128xf32, #tpu.memory_space<vmem>>, vector<1x128xf32>,
    %30 = arith.index_cast %21 : i32 to index
    %c0_17 = arith.constant 0 : index
    %31 = vector.load %arg4[%30, %c0_17] : memref<32x1xf32, #tpu.memory_space<vmem>>, vector<1x1xf32>
    %c1_18 = arith.constant 1 : index
    %c0_19 = arith.constant 0 : index
    %32 = vector.load %arg19[%c1_18, %c0_19] : memref<8x1xf32, #tpu.memory_space<vmem>>, vector<1x1xf32>
    tpu.vector_store %arg19[%c1_18, %c0_19], %31 {strides = array<i32>} : memref<8x1xf32, #tpu.memory_space<vmem>>, vector<1x1xf32>,
    %33 = arith.index_cast %23 : i32 to index
    %c0_20 = arith.constant 0 : index
    %34 = vector.load %arg4[%33, %c0_20] : memref<32x1xf32, #tpu.memory_space<vmem>>, vector<1x1xf32>
    %c1_21 = arith.constant 1 : index
    %c0_22 = arith.constant 0 : index
    %35 = vector.load %arg20[%c1_21, %c0_22] : memref<8x1xf32, #tpu.memory_space<vmem>>, vector<1x1xf32>
    tpu.vector_store %arg20[%c1_21, %c0_22], %34 {strides = array<i32>} : memref<8x1xf32, #tpu.memory_space<vmem>>, vector<1x1xf32>,
    %c8_i32_23 = arith.constant 8 : i32
    %36 = arith.muli %arg0, %c8_i32_23 : i32
    %c2_i32 = arith.constant 2 : i32
    %37 = arith.addi %36, %c2_i32 : i32
    %38 = arith.index_cast %37 : i32 to index
    %39 = memref.load %arg1[%38] : memref<16xi32, #tpu.memory_space<smem>>
    %40 = arith.index_cast %37 : i32 to index
    %41 = memref.load %arg2[%40] : memref<16xi32, #tpu.memory_space<smem>>
    %42 = arith.index_cast %39 : i32 to index
    %c0_24 = arith.constant 0 : index
    %43 = vector.load %arg3[%42, %c0_24] : memref<32x128xf32, #tpu.memory_space<vmem>>, vector<1x128xf32>
    %c2 = arith.constant 2 : index
    %c0_25 = arith.constant 0 : index
    %44 = vector.load %arg17[%c2, %c0_25] : memref<8x128xf32, #tpu.memory_space<vmem>>, vector<1x128xf32>
    tpu.vector_store %arg17[%c2, %c0_25], %43 {strides = array<i32>} : memref<8x128xf32, #tpu.memory_space<vmem>>, vector<1x128xf32>,
    %45 = arith.index_cast %41 : i32 to index
    %c0_26 = arith.constant 0 : index
    %46 = vector.load %arg3[%45, %c0_26] : memref<32x128xf32, #tpu.memory_space<vmem>>, vector<1x128xf32>
    %c2_27 = arith.constant 2 : index
    %c0_28 = arith.constant 0 : index
    %47 = vector.load %arg18[%c2_27, %c0_28] : memref<8x128xf32, #tpu.memory_space<vmem>>, vector<1x128xf32>
    tpu.vector_store %arg18[%c2_27, %c0_28], %46 {strides = array<i32>} : memref<8x128xf32, #tpu.memory_space<vmem>>, vector<1x128xf32>,
    %48 = arith.index_cast %39 : i32 to index
    %c0_29 = arith.constant 0 : index
    %49 = vector.load %arg4[%48, %c0_29] : memref<32x1xf32, #tpu.memory_space<vmem>>, vector<1x1xf32>
    %c2_30 = arith.constant 2 : index
    %c0_31 = arith.constant 0 : index
    %50 = vector.load %arg19[%c2_30, %c0_31] : memref<8x1xf32, #tpu.memory_space<vmem>>, vector<1x1xf32>
    tpu.vector_store %arg19[%c2_30, %c0_31], %49 {strides = array<i32>} : memref<8x1xf32, #tpu.memory_space<vmem>>, vector<1x1xf32>,
    %51 = arith.index_cast %41 : i32 to index
    %c0_32 = arith.constant 0 : index
    %52 = vector.load %arg4[%51, %c0_32] : memref<32x1xf32, #tpu.memory_space<vmem>>, vector<1x1xf32>
    %c2_33 = arith.constant 2 : index
    %c0_34 = arith.constant 0 : index
    %53 = vector.load %arg20[%c2_33, %c0_34] : memref<8x1xf32, #tpu.memory_space<vmem>>, vector<1x1xf32>
    tpu.vector_store %arg20[%c2_33, %c0_34], %52 {strides = array<i32>} : memref<8x1xf32, #tpu.memory_space<vmem>>, vector<1x1xf32>,
    %c8_i32_35 = arith.constant 8 : i32
    %54 = arith.muli %arg0, %c8_i32_35 : i32
    %c3_i32 = arith.constant 3 : i32
    %55 = arith.addi %54, %c3_i32 : i32
    %56 = arith.index_cast %55 : i32 to index
    %57 = memref.load %arg1[%56] : memref<16xi32, #tpu.memory_space<smem>>
    %58 = arith.index_cast %55 : i32 to index
    %59 = memref.load %arg2[%58] : memref<16xi32, #tpu.memory_space<smem>>
    %60 = arith.index_cast %57 : i32 to index
    %c0_36 = arith.constant 0 : index
    %61 = vector.load %arg3[%60, %c0_36] : memref<32x128xf32, #tpu.memory_space<vmem>>, vector<1x128xf32>
    %c3 = arith.constant 3 : index
    %c0_37 = arith.constant 0 : index
    %62 = vector.load %arg17[%c3, %c0_37] : memref<8x128xf32, #tpu.memory_space<vmem>>, vector<1x128xf32>
    tpu.vector_store %arg17[%c3, %c0_37], %61 {strides = array<i32>} : memref<8x128xf32, #tpu.memory_space<vmem>>, vector<1x128xf32>,
    %63 = arith.index_cast %59 : i32 to index
    %c0_38 = arith.constant 0 : index
    %64 = vector.load %arg3[%63, %c0_38] : memref<32x128xf32, #tpu.memory_space<vmem>>, vector<1x128xf32>
    %c3_39 = arith.constant 3 : index
    %c0_40 = arith.constant 0 : index
    %65 = vector.load %arg18[%c3_39, %c0_40] : memref<8x128xf32, #tpu.memory_space<vmem>>, vector<1x128xf32>
    tpu.vector_store %arg18[%c3_39, %c0_40], %64 {strides = array<i32>} : memref<8x128xf32, #tpu.memory_space<vmem>>, vector<1x128xf32>,
    %66 = arith.index_cast %57 : i32 to index
    %c0_41 = arith.constant 0 : index
    %67 = vector.load %arg4[%66, %c0_41] : memref<32x1xf32, #tpu.memory_space<vmem>>, vector<1x1xf32>
    %c3_42 = arith.constant 3 : index
    %c0_43 = arith.constant 0 : index
    %68 = vector.load %arg19[%c3_42, %c0_43] : memref<8x1xf32, #tpu.memory_space<vmem>>, vector<1x1xf32>
    tpu.vector_store %arg19[%c3_42, %c0_43], %67 {strides = array<i32>} : memref<8x1xf32, #tpu.memory_space<vmem>>, vector<1x1xf32>,
    %69 = arith.index_cast %59 : i32 to index
    %c0_44 = arith.constant 0 : index
    %70 = vector.load %arg4[%69, %c0_44] : memref<32x1xf32, #tpu.memory_space<vmem>>, vector<1x1xf32>
    %c3_45 = arith.constant 3 : index
    %c0_46 = arith.constant 0 : index
    %71 = vector.load %arg20[%c3_45, %c0_46] : memref<8x1xf32, #tpu.memory_space<vmem>>, vector<1x1xf32>
    tpu.vector_store %arg20[%c3_45, %c0_46], %70 {strides = array<i32>} : memref<8x1xf32, #tpu.memory_space<vmem>>, vector<1x1xf32>,
    %c8_i32_47 = arith.constant 8 : i32
    %72 = arith.muli %arg0, %c8_i32_47 : i32
    %c4_i32 = arith.constant 4 : i32
    %73 = arith.addi %72, %c4_i32 : i32
    %74 = arith.index_cast %73 : i32 to index
    %75 = memref.load %arg1[%74] : memref<16xi32, #tpu.memory_space<smem>>
    %76 = arith.index_cast %73 : i32 to index
    %77 = memref.load %arg2[%76] : memref<16xi32, #tpu.memory_space<smem>>
    %78 = arith.index_cast %75 : i32 to index
    %c0_48 = arith.constant 0 : index
    %79 = vector.load %arg3[%78, %c0_48] : memref<32x128xf32, #tpu.memory_space<vmem>>, vector<1x128xf32>
    %c4 = arith.constant 4 : index
    %c0_49 = arith.constant 0 : index
    %80 = vector.load %arg17[%c4, %c0_49] : memref<8x128xf32, #tpu.memory_space<vmem>>, vector<1x128xf32>
    tpu.vector_store %arg17[%c4, %c0_49], %79 {strides = array<i32>} : memref<8x128xf32, #tpu.memory_space<vmem>>, vector<1x128xf32>,
    %81 = arith.index_cast %77 : i32 to index
    %c0_50 = arith.constant 0 : index
    %82 = vector.load %arg3[%81, %c0_50] : memref<32x128xf32, #tpu.memory_space<vmem>>, vector<1x128xf32>
    %c4_51 = arith.constant 4 : index
    %c0_52 = arith.constant 0 : index
    %83 = vector.load %arg18[%c4_51, %c0_52] : memref<8x128xf32, #tpu.memory_space<vmem>>, vector<1x128xf32>
    tpu.vector_store %arg18[%c4_51, %c0_52], %82 {strides = array<i32>} : memref<8x128xf32, #tpu.memory_space<vmem>>, vector<1x128xf32>,
    %84 = arith.index_cast %75 : i32 to index
    %c0_53 = arith.constant 0 : index
    %85 = vector.load %arg4[%84, %c0_53] : memref<32x1xf32, #tpu.memory_space<vmem>>, vector<1x1xf32>
    %c4_54 = arith.constant 4 : index
    %c0_55 = arith.constant 0 : index
    %86 = vector.load %arg19[%c4_54, %c0_55] : memref<8x1xf32, #tpu.memory_space<vmem>>, vector<1x1xf32>
    tpu.vector_store %arg19[%c4_54, %c0_55], %85 {strides = array<i32>} : memref<8x1xf32, #tpu.memory_space<vmem>>, vector<1x1xf32>,
    %87 = arith.index_cast %77 : i32 to index
    %c0_56 = arith.constant 0 : index
    %88 = vector.load %arg4[%87, %c0_56] : memref<32x1xf32, #tpu.memory_space<vmem>>, vector<1x1xf32>
    %c4_57 = arith.constant 4 : index
    %c0_58 = arith.constant 0 : index
    %89 = vector.load %arg20[%c4_57, %c0_58] : memref<8x1xf32, #tpu.memory_space<vmem>>, vector<1x1xf32>
    tpu.vector_store %arg20[%c4_57, %c0_58], %88 {strides = array<i32>} : memref<8x1xf32, #tpu.memory_space<vmem>>, vector<1x1xf32>,
    %c8_i32_59 = arith.constant 8 : i32
    %90 = arith.muli %arg0, %c8_i32_59 : i32
    %c5_i32 = arith.constant 5 : i32
    %91 = arith.addi %90, %c5_i32 : i32
    %92 = arith.index_cast %91 : i32 to index
    %93 = memref.load %arg1[%92] : memref<16xi32, #tpu.memory_space<smem>>
    %94 = arith.index_cast %91 : i32 to index
    %95 = memref.load %arg2[%94] : memref<16xi32, #tpu.memory_space<smem>>
    %96 = arith.index_cast %93 : i32 to index
    %c0_60 = arith.constant 0 : index
    %97 = vector.load %arg3[%96, %c0_60] : memref<32x128xf32, #tpu.memory_space<vmem>>, vector<1x128xf32>
    %c5 = arith.constant 5 : index
    %c0_61 = arith.constant 0 : index
    %98 = vector.load %arg17[%c5, %c0_61] : memref<8x128xf32, #tpu.memory_space<vmem>>, vector<1x128xf32>
    tpu.vector_store %arg17[%c5, %c0_61], %97 {strides = array<i32>} : memref<8x128xf32, #tpu.memory_space<vmem>>, vector<1x128xf32>,
    %99 = arith.index_cast %95 : i32 to index
    %c0_62 = arith.constant 0 : index
    %100 = vector.load %arg3[%99, %c0_62] : memref<32x128xf32, #tpu.memory_space<vmem>>, vector<1x128xf32>
    %c5_63 = arith.constant 5 : index
    %c0_64 = arith.constant 0 : index
    %101 = vector.load %arg18[%c5_63, %c0_64] : memref<8x128xf32, #tpu.memory_space<vmem>>, vector<1x128xf32>
    tpu.vector_store %arg18[%c5_63, %c0_64], %100 {strides = array<i32>} : memref<8x128xf32, #tpu.memory_space<vmem>>, vector<1x128xf32>,
    %102 = arith.index_cast %93 : i32 to index
    %c0_65 = arith.constant 0 : index
    %103 = vector.load %arg4[%102, %c0_65] : memref<32x1xf32, #tpu.memory_space<vmem>>, vector<1x1xf32>
    %c5_66 = arith.constant 5 : index
    %c0_67 = arith.constant 0 : index
    %104 = vector.load %arg19[%c5_66, %c0_67] : memref<8x1xf32, #tpu.memory_space<vmem>>, vector<1x1xf32>
    tpu.vector_store %arg19[%c5_66, %c0_67], %103 {strides = array<i32>} : memref<8x1xf32, #tpu.memory_space<vmem>>, vector<1x1xf32>,
    %105 = arith.index_cast %95 : i32 to index
    %c0_68 = arith.constant 0 : index
    %106 = vector.load %arg4[%105, %c0_68] : memref<32x1xf32, #tpu.memory_space<vmem>>, vector<1x1xf32>
    %c5_69 = arith.constant 5 : index
    %c0_70 = arith.constant 0 : index
    %107 = vector.load %arg20[%c5_69, %c0_70] : memref<8x1xf32, #tpu.memory_space<vmem>>, vector<1x1xf32>
    tpu.vector_store %arg20[%c5_69, %c0_70], %106 {strides = array<i32>} : memref<8x1xf32, #tpu.memory_space<vmem>>, vector<1x1xf32>,
    %c8_i32_71 = arith.constant 8 : i32
    %108 = arith.muli %arg0, %c8_i32_71 : i32
    %c6_i32 = arith.constant 6 : i32
    %109 = arith.addi %108, %c6_i32 : i32
    %110 = arith.index_cast %109 : i32 to index
    %111 = memref.load %arg1[%110] : memref<16xi32, #tpu.memory_space<smem>>
    %112 = arith.index_cast %109 : i32 to index
    %113 = memref.load %arg2[%112] : memref<16xi32, #tpu.memory_space<smem>>
    %114 = arith.index_cast %111 : i32 to index
    %c0_72 = arith.constant 0 : index
    %115 = vector.load %arg3[%114, %c0_72] : memref<32x128xf32, #tpu.memory_space<vmem>>, vector<1x128xf32>
    %c6 = arith.constant 6 : index
    %c0_73 = arith.constant 0 : index
    %116 = vector.load %arg17[%c6, %c0_73] : memref<8x128xf32, #tpu.memory_space<vmem>>, vector<1x128xf32>
    tpu.vector_store %arg17[%c6, %c0_73], %115 {strides = array<i32>} : memref<8x128xf32, #tpu.memory_space<vmem>>, vector<1x128xf32>,
    %117 = arith.index_cast %113 : i32 to index
    %c0_74 = arith.constant 0 : index
    %118 = vector.load %arg3[%117, %c0_74] : memref<32x128xf32, #tpu.memory_space<vmem>>, vector<1x128xf32>
    %c6_75 = arith.constant 6 : index
    %c0_76 = arith.constant 0 : index
    %119 = vector.load %arg18[%c6_75, %c0_76] : memref<8x128xf32, #tpu.memory_space<vmem>>, vector<1x128xf32>
    tpu.vector_store %arg18[%c6_75, %c0_76], %118 {strides = array<i32>} : memref<8x128xf32, #tpu.memory_space<vmem>>, vector<1x128xf32>,
    %120 = arith.index_cast %111 : i32 to index
    %c0_77 = arith.constant 0 : index
    %121 = vector.load %arg4[%120, %c0_77] : memref<32x1xf32, #tpu.memory_space<vmem>>, vector<1x1xf32>
    %c6_78 = arith.constant 6 : index
    %c0_79 = arith.constant 0 : index
    %122 = vector.load %arg19[%c6_78, %c0_79] : memref<8x1xf32, #tpu.memory_space<vmem>>, vector<1x1xf32>
    tpu.vector_store %arg19[%c6_78, %c0_79], %121 {strides = array<i32>} : memref<8x1xf32, #tpu.memory_space<vmem>>, vector<1x1xf32>,
    %123 = arith.index_cast %113 : i32 to index
    %c0_80 = arith.constant 0 : index
    %124 = vector.load %arg4[%123, %c0_80] : memref<32x1xf32, #tpu.memory_space<vmem>>, vector<1x1xf32>
    %c6_81 = arith.constant 6 : index
    %c0_82 = arith.constant 0 : index
    %125 = vector.load %arg20[%c6_81, %c0_82] : memref<8x1xf32, #tpu.memory_space<vmem>>, vector<1x1xf32>
    tpu.vector_store %arg20[%c6_81, %c0_82], %124 {strides = array<i32>} : memref<8x1xf32, #tpu.memory_space<vmem>>, vector<1x1xf32>,
    %c8_i32_83 = arith.constant 8 : i32
    %126 = arith.muli %arg0, %c8_i32_83 : i32
    %c7_i32 = arith.constant 7 : i32
    %127 = arith.addi %126, %c7_i32 : i32
    %128 = arith.index_cast %127 : i32 to index
    %129 = memref.load %arg1[%128] : memref<16xi32, #tpu.memory_space<smem>>
    %130 = arith.index_cast %127 : i32 to index
    %131 = memref.load %arg2[%130] : memref<16xi32, #tpu.memory_space<smem>>
    %132 = arith.index_cast %129 : i32 to index
    %c0_84 = arith.constant 0 : index
    %133 = vector.load %arg3[%132, %c0_84] : memref<32x128xf32, #tpu.memory_space<vmem>>, vector<1x128xf32>
    %c7 = arith.constant 7 : index
    %c0_85 = arith.constant 0 : index
    %134 = vector.load %arg17[%c7, %c0_85] : memref<8x128xf32, #tpu.memory_space<vmem>>, vector<1x128xf32>
    tpu.vector_store %arg17[%c7, %c0_85], %133 {strides = array<i32>} : memref<8x128xf32, #tpu.memory_space<vmem>>, vector<1x128xf32>,
    %135 = arith.index_cast %131 : i32 to index
    %c0_86 = arith.constant 0 : index
    %136 = vector.load %arg3[%135, %c0_86] : memref<32x128xf32, #tpu.memory_space<vmem>>, vector<1x128xf32>
    %c7_87 = arith.constant 7 : index
    %c0_88 = arith.constant 0 : index
    %137 = vector.load %arg18[%c7_87, %c0_88] : memref<8x128xf32, #tpu.memory_space<vmem>>, vector<1x128xf32>
    tpu.vector_store %arg18[%c7_87, %c0_88], %136 {strides = array<i32>} : memref<8x128xf32, #tpu.memory_space<vmem>>, vector<1x128xf32>,
    %138 = arith.index_cast %129 : i32 to index
    %c0_89 = arith.constant 0 : index
    %139 = vector.load %arg4[%138, %c0_89] : memref<32x1xf32, #tpu.memory_space<vmem>>, vector<1x1xf32>
    %c7_90 = arith.constant 7 : index
    %c0_91 = arith.constant 0 : index
    %140 = vector.load %arg19[%c7_90, %c0_91] : memref<8x1xf32, #tpu.memory_space<vmem>>, vector<1x1xf32>
    tpu.vector_store %arg19[%c7_90, %c0_91], %139 {strides = array<i32>} : memref<8x1xf32, #tpu.memory_space<vmem>>, vector<1x1xf32>,
    %141 = arith.index_cast %131 : i32 to index
    %c0_92 = arith.constant 0 : index
    %142 = vector.load %arg4[%141, %c0_92] : memref<32x1xf32, #tpu.memory_space<vmem>>, vector<1x1xf32>
    %c7_93 = arith.constant 7 : index
    %c0_94 = arith.constant 0 : index
    %143 = vector.load %arg20[%c7_93, %c0_94] : memref<8x1xf32, #tpu.memory_space<vmem>>, vector<1x1xf32>
    tpu.vector_store %arg20[%c7_93, %c0_94], %142 {strides = array<i32>} : memref<8x1xf32, #tpu.memory_space<vmem>>, vector<1x1xf32>,
    %c0_95 = arith.constant 0 : index
    %c0_96 = arith.constant 0 : index
    %144 = vector.load %arg5[%c0_95, %c0_96] : memref<1x128xf32, #tpu.memory_space<vmem>>, vector<1x128xf32>
    %c0_97 = arith.constant 0 : index
    %c0_98 = arith.constant 0 : index
    %145 = vector.load %arg6[%c0_97, %c0_98] : memref<1x128xf32, #tpu.memory_space<vmem>>, vector<1x128xf32>
    %c0_99 = arith.constant 0 : index
    %c0_100 = arith.constant 0 : index
    %146 = vector.load %arg17[%c0_99, %c0_100] : memref<8x128xf32, #tpu.memory_space<vmem>>, vector<8x128xf32>
    %c0_101 = arith.constant 0 : index
    %c0_102 = arith.constant 0 : index
    %147 = vector.load %arg18[%c0_101, %c0_102] : memref<8x128xf32, #tpu.memory_space<vmem>>, vector<8x128xf32>
    %c0_103 = arith.constant 0 : index
    %c0_104 = arith.constant 0 : index
    %148 = vector.load %arg19[%c0_103, %c0_104] : memref<8x1xf32, #tpu.memory_space<vmem>>, vector<8x1xf32>
    %149 = vector.broadcast %148 : vector<8x1xf32> to vector<8x128xf32>
    %150 = vector.broadcast %144 : vector<1x128xf32> to vector<8x128xf32>
    %151 = arith.mulf %149, %150 : vector<8x128xf32>
    %152 = vector.broadcast %145 : vector<1x128xf32> to vector<8x128xf32>
    %153 = arith.addf %151, %152 : vector<8x128xf32>
    %154 = math.cos %153 : vector<8x128xf32>
    %155 = arith.addf %146, %154 : vector<8x128xf32>
    %c0_105 = arith.constant 0 : index
    %c0_106 = arith.constant 0 : index
    %156 = vector.load %arg20[%c0_105, %c0_106] : memref<8x1xf32, #tpu.memory_space<vmem>>, vector<8x1xf32>
    %157 = vector.broadcast %156 : vector<8x1xf32> to vector<8x128xf32>
    %158 = vector.broadcast %144 : vector<1x128xf32> to vector<8x128xf32>
    %159 = arith.mulf %157, %158 : vector<8x128xf32>
    %160 = vector.broadcast %145 : vector<1x128xf32> to vector<8x128xf32>
    %161 = arith.addf %159, %160 : vector<8x128xf32>
    %162 = math.cos %161 : vector<8x128xf32>
    %163 = arith.addf %147, %162 : vector<8x128xf32>
    %c0_107 = arith.constant 0 : index
    %c0_108 = arith.constant 0 : index
    %164 = vector.load %arg7[%c0_107, %c0_108] : memref<128x128xf32, #tpu.memory_space<vmem>>, vector<128x128xf32>
    %cst = arith.constant dense<0.000000e+00> : vector<8x128xf32>
    %165 = tpu.matmul %147, %164, %cst {dimension_numbers = #tpu.dot_dimension_numbers<[1], [0], [0], [1], [0, 0, 1, 1], [], []>} : vector<8x128xf32>, vector<128x128xf32>, vector<8x128xf32> -> vector<8x128xf32>
    %166 = math.tanh %165 : vector<8x128xf32>
    %c0_109 = arith.constant 0 : index
    %c0_110 = arith.constant 0 : index
    %167 = vector.load %arg8[%c0_109, %c0_110] : memref<128x128xf32, #tpu.memory_space<vmem>>, vector<128x128xf32>
    %cst_111 = arith.constant dense<0.000000e+00> : vector<8x128xf32>
    %168 = tpu.matmul %163, %167, %cst_111 {dimension_numbers = #tpu.dot_dimension_numbers<[1], [0], [0], [1], [0, 0, 1, 1], [], []>} : vector<8x128xf32>, vector<128x128xf32>, vector<8x128xf32> -> vector<8x128xf32>
    %c0_112 = arith.constant 0 : index
    %c0_113 = arith.constant 0 : index
    %169 = vector.load %arg9[%c0_112, %c0_113] : memref<128x128xf32, #tpu.memory_space<vmem>>, vector<128x128xf32>
    %cst_114 = arith.constant dense<0.000000e+00> : vector<8x128xf32>
    %170 = tpu.matmul %166, %169, %cst_114 {dimension_numbers = #tpu.dot_dimension_numbers<[1], [0], [0], [1], [0, 0, 1, 1], [], []>} : vector<8x128xf32>, vector<128x128xf32>, vector<8x128xf32> -> vector<8x128xf32>
    %171 = arith.addf %168, %170 : vector<8x128xf32>
    %c0_115 = arith.constant 0 : index
    %c0_116 = arith.constant 0 : index
    %172 = vector.load %arg10[%c0_115, %c0_116] : memref<1x128xf32, #tpu.memory_space<vmem>>, vector<1x128xf32>
    %173 = vector.broadcast %172 : vector<1x128xf32> to vector<8x128xf32>
    %174 = arith.addf %171, %173 : vector<8x128xf32>
    %c0_117 = arith.constant 0 : index
    %c0_118 = arith.constant 0 : index
    %175 = vector.load %arg11[%c0_117, %c0_118] : memref<128x128xf32, #tpu.memory_space<vmem>>, vector<128x128xf32>
    %cst_119 = arith.constant dense<0.000000e+00> : vector<8x128xf32>
    %176 = tpu.matmul %155, %175, %cst_119 {dimension_numbers = #tpu.dot_dimension_numbers<[1], [0], [0], [1], [0, 0, 1, 1], [], []>} : vector<8x128xf32>, vector<128x128xf32>, vector<8x128xf32> -> vector<8x128xf32>
    %c0_120 = arith.constant 0 : index
    %c0_121 = arith.constant 0 : index
    %177 = vector.load %arg12[%c0_120, %c0_121] : memref<128x128xf32, #tpu.memory_space<vmem>>, vector<128x128xf32>
    %cst_122 = arith.constant dense<0.000000e+00> : vector<8x128xf32>
    %178 = tpu.matmul %174, %177, %cst_122 {dimension_numbers = #tpu.dot_dimension_numbers<[1], [0], [0], [1], [0, 0, 1, 1], [], []>} : vector<8x128xf32>, vector<128x128xf32>, vector<8x128xf32> -> vector<8x128xf32>
    %179 = arith.addf %176, %178 : vector<8x128xf32>
    %c0_123 = arith.constant 0 : index
    %c0_124 = arith.constant 0 : index
    %180 = vector.load %arg13[%c0_123, %c0_124] : memref<1x128xf32, #tpu.memory_space<vmem>>, vector<1x128xf32>
    %181 = vector.broadcast %180 : vector<1x128xf32> to vector<8x128xf32>
    %182 = arith.addf %179, %181 : vector<8x128xf32>
    %cst_125 = arith.constant 0.000000e+00 : f32
    %183 = vector.broadcast %cst_125 : f32 to vector<8x128xf32>
    %184 = arith.maximumf %182, %183 : vector<8x128xf32>
    %c0_126 = arith.constant 0 : index
    %c0_127 = arith.constant 0 : index
    %185 = vector.load %arg14[%c0_126, %c0_127] : memref<1x128xf32, #tpu.memory_space<vmem>>, vector<1x128xf32>
    %186 = vector.broadcast %185 : vector<1x128xf32> to vector<8x128xf32>
    %187 = arith.mulf %184, %186 : vector<8x128xf32>
    %cst_128 = arith.constant dense<0.000000e+00> : vector<8xf32>
    %188 = vector.multi_reduction <add>, %187, %cst_128 [1] : vector<8x128xf32> to vector<8xf32>
    %189 = vector.shape_cast %188 : vector<8xf32> to vector<8x1xf32>
    %c0_129 = arith.constant 0 : index
    %c0_130 = arith.constant 0 : index
    %190 = vector.load %arg15[%c0_129, %c0_130] : memref<1x1xf32, #tpu.memory_space<vmem>>, vector<1x1xf32>
    %191 = vector.broadcast %190 : vector<1x1xf32> to vector<8x1xf32>
    %192 = arith.addf %189, %191 : vector<8x1xf32>
    %193 = arith.negf %192 : vector<8x1xf32>
    %194 = math.exp %193 : vector<8x1xf32>
    %cst_131 = arith.constant 1.000000e+00 : f32
    %195 = vector.broadcast %cst_131 : f32 to vector<8x1xf32>
    %196 = arith.addf %195, %194 : vector<8x1xf32>
    %197 = arith.divf %195, %196 : vector<8x1xf32>
    %c0_132 = arith.constant 0 : index
    %c0_133 = arith.constant 0 : index
    %198 = vector.load %arg16[%c0_132, %c0_133] : memref<8x1xf32, #tpu.memory_space<vmem>>, vector<8x1xf32>
    tpu.vector_store %arg16[%c0_132, %c0_133], %197 {strides = array<i32>} : memref<8x1xf32, #tpu.memory_space<vmem>>, vector<8x1xf32>,
    return
  }
  func.func @transform_0(%arg0: i32, %arg1: memref<16xi32, #tpu.memory_space<smem>>, %arg2: memref<16xi32, #tpu.memory_space<smem>>) -> (i32, i32) {
    %c0_i32 = arith.constant 0 : i32
    %c0_i32_0 = arith.constant 0 : i32
    %c0_i32_1 = arith.constant 0 : i32
    return %c0_i32, %c0_i32_0 : i32, i32
  }
  func.func @transform_1(%arg0: i32, %arg1: memref<16xi32, #tpu.memory_space<smem>>, %arg2: memref<16xi32, #tpu.memory_space<smem>>) -> (i32, i32) {
    %c0_i32 = arith.constant 0 : i32
    %c0_i32_0 = arith.constant 0 : i32
    %c0_i32_1 = arith.constant 0 : i32
    return %c0_i32, %c0_i32_0 : i32, i32
  }
  func.func @transform_2(%arg0: i32, %arg1: memref<16xi32, #tpu.memory_space<smem>>, %arg2: memref<16xi32, #tpu.memory_space<smem>>) -> (i32, i32) {
    %c0_i32 = arith.constant 0 : i32
    %c0_i32_0 = arith.constant 0 : i32
    %c0_i32_1 = arith.constant 0 : i32
    return %c0_i32, %c0_i32_0 : i32, i32
  }
  func.func @transform_3(%arg0: i32, %arg1: memref<16xi32, #tpu.memory_space<smem>>, %arg2: memref<16xi32, #tpu.memory_space<smem>>) -> (i32, i32) {
    %c0_i32 = arith.constant 0 : i32
    %c0_i32_0 = arith.constant 0 : i32
    %c0_i32_1 = arith.constant 0 : i32
    return %c0_i32, %c0_i32_0 : i32, i32
  }
  func.func @transform_4(%arg0: i32, %arg1: memref<16xi32, #tpu.memory_space<smem>>, %arg2: memref<16xi32, #tpu.memory_space<smem>>) -> (i32, i32) {
    %c0_i32 = arith.constant 0 : i32
    %c0_i32_0 = arith.constant 0 : i32
    %c0_i32_1 = arith.constant 0 : i32
    return %c0_i32, %c0_i32_0 : i32, i32
  }
  func.func @transform_5(%arg0: i32, %arg1: memref<16xi32, #tpu.memory_space<smem>>, %arg2: memref<16xi32, #tpu.memory_space<smem>>) -> (i32, i32) {
    %c0_i32 = arith.constant 0 : i32
    %c0_i32_0 = arith.constant 0 : i32
    %c0_i32_1 = arith.constant 0 : i32
    return %c0_i32, %c0_i32_0 : i32, i32
  }
  func.func @transform_6(%arg0: i32, %arg1: memref<16xi32, #tpu.memory_space<smem>>, %arg2: memref<16xi32, #tpu.memory_space<smem>>) -> (i32, i32) {
    %c0_i32 = arith.constant 0 : i32
    %c0_i32_0 = arith.constant 0 : i32
    %c0_i32_1 = arith.constant 0 : i32
    return %c0_i32, %c0_i32_0 : i32, i32
  }
  func.func @transform_7(%arg0: i32, %arg1: memref<16xi32, #tpu.memory_space<smem>>, %arg2: memref<16xi32, #tpu.memory_space<smem>>) -> (i32, i32) {
    %c0_i32 = arith.constant 0 : i32
    %c0_i32_0 = arith.constant 0 : i32
    %c0_i32_1 = arith.constant 0 : i32
    return %c0_i32, %c0_i32_0 : i32, i32
  }
  func.func @transform_8(%arg0: i32, %arg1: memref<16xi32, #tpu.memory_space<smem>>, %arg2: memref<16xi32, #tpu.memory_space<smem>>) -> (i32, i32) {
    %c0_i32 = arith.constant 0 : i32
    %c0_i32_0 = arith.constant 0 : i32
    %c0_i32_1 = arith.constant 0 : i32
    return %c0_i32, %c0_i32_0 : i32, i32
  }
  func.func @transform_9(%arg0: i32, %arg1: memref<16xi32, #tpu.memory_space<smem>>, %arg2: memref<16xi32, #tpu.memory_space<smem>>) -> (i32, i32) {
    %c0_i32 = arith.constant 0 : i32
    %c0_i32_0 = arith.constant 0 : i32
    %c0_i32_1 = arith.constant 0 : i32
    return %c0_i32, %c0_i32_0 : i32, i32
  }
  func.func @transform_10(%arg0: i32, %arg1: memref<16xi32, #tpu.memory_space<smem>>, %arg2: memref<16xi32, #tpu.memory_space<smem>>) -> (i32, i32) {
    %c0_i32 = arith.constant 0 : i32
    %c0_i32_0 = arith.constant 0 : i32
    %c0_i32_1 = arith.constant 0 : i32
    return %c0_i32, %c0_i32_0 : i32, i32
  }
  func.func @transform_11(%arg0: i32, %arg1: memref<16xi32, #tpu.memory_space<smem>>, %arg2: memref<16xi32, #tpu.memory_space<smem>>) -> (i32, i32) {
    %c0_i32 = arith.constant 0 : i32
    %c0_i32_0 = arith.constant 0 : i32
    %c0_i32_1 = arith.constant 0 : i32
    return %c0_i32, %c0_i32_0 : i32, i32
  }
  func.func @transform_12(%arg0: i32, %arg1: memref<16xi32, #tpu.memory_space<smem>>, %arg2: memref<16xi32, #tpu.memory_space<smem>>) -> (i32, i32) {
    %c0_i32 = arith.constant 0 : i32
    %c0_i32_0 = arith.constant 0 : i32
    %c0_i32_1 = arith.constant 0 : i32
    return %c0_i32, %c0_i32_0 : i32, i32
  }
  func.func @transform_13(%arg0: i32, %arg1: memref<16xi32, #tpu.memory_space<smem>>, %arg2: memref<16xi32, #tpu.memory_space<smem>>) -> (i32, i32) {
    %c0_i32 = arith.constant 0 : i32
    %c0_i32_0 = arith.constant 0 : i32
    return %arg0, %c0_i32 : i32, i32
  }
}

</mosaic_0001>

<llo_original>
// kernel: tpu_custom_call.1
$region0: #{tpu_custom_call.1}
  #allocation0 [shape = 'u32[]', space=smem, size = 0x4, offset = 0x4, fixed_abs, tag = 'smem constant byte address 0x4 - core index']
  #allocation1 [shape = 'u32[144,128]{1,0:T(1,128)}', space=vmem, size = 0x12000, scoped, tag = 'internal scratch']
  #allocation2 [shape = 'f32[8,128]{1,0:T(8,128)}', space=vmem, size = 0x1000, scoped, tag = 'scratch operand']
  #allocation3 [shape = 'f32[8,128]{1,0:T(8,128)}', space=vmem, size = 0x1000, scoped, tag = 'scratch operand']
  #allocation4 [shape = 'f32[8,1]{1,0:T(8,128)}', space=vmem, size = 0x1000, scoped, tag = 'scratch operand']
  #allocation5 [shape = 'f32[8,1]{1,0:T(8,128)}', space=vmem, size = 0x1000, scoped, tag = 'scratch operand']
  #allocation6 [shape = 's32[1]{0}', space=sflag, size = 0x4, scoped, tag = 'scoped memory for tpu_custom_call.1']
  #allocation7 [shape = 'u8[512]{0}', space=smem, size = 0x200, scoped, tag = 'prefetched SMEM operand 0']
  #allocation8 [shape = 'u8[512]{0}', space=smem, size = 0x200, scoped, tag = 'prefetched SMEM operand 1']
  #allocation9 [shape = 'f32[1,1]{1,0:T(1,128)S(1)}', space=vmem, size = 0x200, scoped, tag = 'scoped memory for tpu_custom_call.1']
  %s0 = inlined_call_operand.vmem [shape: s32[16], index: 0, kind: input, shape index: {}]
  %s1 = inlined_call_operand.vmem [shape: s32[16], index: 1, kind: input, shape index: {}]
  %s2 = inlined_call_operand.vmem [shape: f32[32,128], index: 2, kind: input, shape index: {}]
  %s3 = inlined_call_operand.vmem [shape: f32[32,1], index: 3, kind: input, shape index: {}]
  %s4 = inlined_call_operand.vmem [shape: f32[1,128], index: 4, kind: input, shape index: {}]
  %s5 = inlined_call_operand.vmem [shape: f32[1,128], index: 5, kind: input, shape index: {}]
  %s6 = inlined_call_operand.hbm [shape: f32[128,128], index: 6, kind: input, shape index: {}]
  %s7 = inlined_call_operand.hbm [shape: f32[128,128], index: 7, kind: input, shape index: {}]
  %s8 = inlined_call_operand.hbm [shape: f32[128,128], index: 8, kind: input, shape index: {}]
  %s9 = inlined_call_operand.vmem [shape: f32[1,128], index: 9, kind: input, shape index: {}]
  %s10 = inlined_call_operand.hbm [shape: f32[128,128], index: 10, kind: input, shape index: {}]
  %s11 = inlined_call_operand.hbm [shape: f32[128,128], index: 11, kind: input, shape index: {}]
  %s12 = inlined_call_operand.vmem [shape: f32[1,128], index: 12, kind: input, shape index: {}]
  %s13 = inlined_call_operand.vmem [shape: f32[1,128], index: 13, kind: input, shape index: {}]
  %s14 = inlined_call_operand.<no memory space> [shape: f32[1,1], index: 14, kind: input, shape index: {}]
  %s15 = inlined_call_operand.vmem [shape: f32[16,1], index: 15, kind: output, shape index: {}]
  %s16 = sld [smem:[#allocation0]]
  $region105: #{tpu_custom_call.1} parent=0
    _
  %s18 = ssub.s32 1, %s16
  %s19 = scalar_select 0, %s18, %s16
  %s20 = sshll.u32 %s0, 4
  %s21 = int_to_ptr.vmem [resolvable:$true] %s20
  %23 = dma.vmem_to_smem %s21, 16, [#allocation7], [#allocation6]
  %s24 = sshll.u32 %s1, 4
  %s25 = int_to_ptr.vmem [resolvable:$true] %s24
  %27 = dma.vmem_to_smem %s25, 16, [#allocation8], [#allocation6]
  %v28 = vstv %s14
  %29 = vst [vmem:[#allocation9] sm:$0x1] %v28
  %30 = dma.done [#allocation6], 32
  %31 = sfence
  $region1: #{tpu_custom_call.1} parent=0
    #allocation10 [shape = 'u8[65536]{0}', space=vmem, size = 0x10000, scoped, tag = 'input window, operand 6, single buffered']
    #allocation11 [shape = 's32[2]{0}', space=sflag, size = 0x8, scoped, tag = 'scoped memory for tpu_custom_call.1']
    #allocation12 [shape = 'u8[65536]{0}', space=vmem, size = 0x10000, scoped, tag = 'input window, operand 7, single buffered']
    #allocation13 [shape = 's32[1]{0}', space=sflag, size = 0x4, scoped, tag = 'scoped memory for tpu_custom_call.1']
    #allocation14 [shape = 'u8[65536]{0}', space=vmem, size = 0x10000, scoped, tag = 'input window, operand 8, single buffered']
    #allocation15 [shape = 'u8[65536]{0}', space=vmem, size = 0x10000, scoped, tag = 'input window, operand 10, single buffered']
    #allocation16 [shape = 's32[1]{0}', space=sflag, size = 0x4, scoped, tag = 'scoped memory for tpu_custom_call.1']
    #allocation17 [shape = 'u8[65536]{0}', space=vmem, size = 0x10000, scoped, tag = 'input window, operand 11, single buffered']
    %32 = vsyncpa [#allocation11], 0
    %33 = vsyncpa [#allocation13], 0
    %34 = vsyncpa [#allocation16], 0
    loop: start=0, step=1, limit=4
    $region2: #{tpu_custom_call.1} parent=1 // loop_pre_header
      _
    $region3: #{tpu_custom_call.1} parent=1 // loop_header
      %s36 = sphi 0, %s40
      %p37 = scmp.ge.s32.totalorder %s36, 4
      %s44 = sphi 0, %s44
      %s46 = sphi 0, %s44
      %s47 = sphi 0, %s46
      %s61 = sphi 0, %s47
      %s65 = sphi 0, %s65
      %s67 = sphi 0, %s65
      %s68 = sphi 0, %s67
      %s82 = sphi 0, %s68
      %s86 = sphi 0, %s86
      %s88 = sphi 0, %s86
      %s89 = sphi 0, %s88
      %s103 = sphi 0, %s89
      %s107 = sphi 0, %s107
      %s109 = sphi 0, %s107
      %s110 = sphi 0, %s109
      %s124 = sphi 0, %s110
      %s128 = sphi 0, %s128
      %s130 = sphi 0, %s128
      %s131 = sphi 0, %s130
      %s145 = sphi 0, %s131
      %s149 = sphi 0, %s149
      %s151 = sphi 0, %s149
      %s152 = sphi 0, %s151
      %s166 = sphi 0, %s152
      %s170 = sphi 0, %s170
      %s172 = sphi 0, %s170
      %s173 = sphi 0, %s172
      %s187 = sphi 0, %s173
      %s191 = sphi 0, %s191
      %s193 = sphi 0, %s191
      %s194 = sphi 0, %s193
      %s208 = sphi 0, %s194
      %s212 = sphi 0, %s212
      %s214 = sphi 0, %s212
      %s215 = sphi 0, %s214
      %s229 = sphi 0, %s215
      %s233 = sphi 0, %s233
      %s235 = sphi 0, %s233
      %s236 = sphi 0, %s235
      %s250 = sphi 0, %s236
      %s254 = sphi 0, %s254
      %s256 = sphi 0, %s254
      %s257 = sphi 0, %s256
      %s271 = sphi 0, %s257
      %s275 = sphi 0, %s275
      %s277 = sphi 0, %s275
      %s278 = sphi 0, %s277
      %s292 = sphi 0, %s278
      %s296 = sphi 0, %s296
      %s298 = sphi 0, %s296
      %s299 = sphi 0, %s298
      %s313 = sphi 0, %s299
      %s319 = sphi 0, %s321
      %s322 = sphi 0, %s319
      %s323 = sphi 0, %s322
      %s339 = sphi 0, %s323
    $region4: #{tpu_custom_call.1} parent=1 // loop_header_branch
      %39 = sbr.rel (%p37) target = $region8
    $region5: #{tpu_custom_call.1} parent=1 // loop_body
      %s41 = ssub.s32 %s36, 1
      %s42 = ssub.s32 %s36, 2
      %s43 = sadd.s32 %s36, 1
      %s45 = sadd.s32 %s44, 1
      %p48 = scmp.eq.s32.totalorder %s36, 1
      %p49 = scmp.ne.s32.totalorder %s44, %s46
      %p50 = scmp.eq.s32.totalorder %s36, 0
      %p51 = por %p49, %p50
      %p52 = scmp.ne.s32.totalorder %s44, %s46
      %p53 = scmp.eq.s32.totalorder %s41, 1
      %p54 = por %p52, %p53
      %p55 = scmp.ne.s32.totalorder %s46, %s47
      %p56 = scmp.eq.s32.totalorder %s41, 0
      %p57 = por %p55, %p56
      %p58 = scmp.ne.s32.totalorder %s46, %s47
      %p59 = scmp.eq.s32.totalorder %s42, 1
      %p60 = por %p58, %p59
      %p62 = scmp.ne.s32.totalorder %s47, %s61
      %p63 = scmp.eq.s32.totalorder %s42, 0
      %p64 = por %p62, %p63
      %s66 = sadd.s32 %s65, 1
      %p69 = scmp.eq.s32.totalorder %s36, 1
      %p70 = scmp.ne.s32.totalorder %s65, %s67
      %p71 = scmp.eq.s32.totalorder %s36, 0
      %p72 = por %p70, %p71
      %p73 = scmp.ne.s32.totalorder %s65, %s67
      %p74 = scmp.eq.s32.totalorder %s41, 1
      %p75 = por %p73, %p74
      %p76 = scmp.ne.s32.totalorder %s67, %s68
      %p77 = scmp.eq.s32.totalorder %s41, 0
      %p78 = por %p76, %p77
      %p79 = scmp.ne.s32.totalorder %s67, %s68
      %p80 = scmp.eq.s32.totalorder %s42, 1
      %p81 = por %p79, %p80
      %p83 = scmp.ne.s32.totalorder %s68, %s82
      %p84 = scmp.eq.s32.totalorder %s42, 0
      %p85 = por %p83, %p84
      %s87 = sadd.s32 %s86, 1
      %p90 = scmp.eq.s32.totalorder %s36, 1
      %p91 = scmp.ne.s32.totalorder %s86, %s88
      %p92 = scmp.eq.s32.totalorder %s36, 0
      %p93 = por %p91, %p92
      %p94 = scmp.ne.s32.totalorder %s86, %s88
      %p95 = scmp.eq.s32.totalorder %s41, 1
      %p96 = por %p94, %p95
      %p97 = scmp.ne.s32.totalorder %s88, %s89
      %p98 = scmp.eq.s32.totalorder %s41, 0
      %p99 = por %p97, %p98
      %p100 = scmp.ne.s32.totalorder %s88, %s89
      %p101 = scmp.eq.s32.totalorder %s42, 1
      %p102 = por %p100, %p101
      %p104 = scmp.ne.s32.totalorder %s89, %s103
      %p105 = scmp.eq.s32.totalorder %s42, 0
      %p106 = por %p104, %p105
      %s108 = sadd.s32 %s107, 1
      %p111 = scmp.eq.s32.totalorder %s36, 1
      %p112 = scmp.ne.s32.totalorder %s107, %s109
      %p113 = scmp.eq.s32.totalorder %s36, 0
      %p114 = por %p112, %p113
      %p115 = scmp.ne.s32.totalorder %s107, %s109
      %p116 = scmp.eq.s32.totalorder %s41, 1
      %p117 = por %p115, %p116
      %p118 = scmp.ne.s32.totalorder %s109, %s110
      %p119 = scmp.eq.s32.totalorder %s41, 0
      %p120 = por %p118, %p119
      %p121 = scmp.ne.s32.totalorder %s109, %s110
      %p122 = scmp.eq.s32.totalorder %s42, 1
      %p123 = por %p121, %p122
      %p125 = scmp.ne.s32.totalorder %s110, %s124
      %p126 = scmp.eq.s32.totalorder %s42, 0
      %p127 = por %p125, %p126
      %s129 = sadd.s32 %s128, 1
      %p132 = scmp.eq.s32.totalorder %s36, 1
      %p133 = scmp.ne.s32.totalorder %s128, %s130
      %p134 = scmp.eq.s32.totalorder %s36, 0
      %p135 = por %p133, %p134
      %p136 = scmp.ne.s32.totalorder %s128, %s130
      %p137 = scmp.eq.s32.totalorder %s41, 1
      %p138 = por %p136, %p137
      %p139 = scmp.ne.s32.totalorder %s130, %s131
      %p140 = scmp.eq.s32.totalorder %s41, 0
      %p141 = por %p139, %p140
      %p142 = scmp.ne.s32.totalorder %s130, %s131
      %p143 = scmp.eq.s32.totalorder %s42, 1
      %p144 = por %p142, %p143
      %p146 = scmp.ne.s32.totalorder %s131, %s145
      %p147 = scmp.eq.s32.totalorder %s42, 0
      %p148 = por %p146, %p147
      %s150 = sadd.s32 %s149, 1
      %p153 = scmp.eq.s32.totalorder %s36, 1
      %p154 = scmp.ne.s32.totalorder %s149, %s151
      %p155 = scmp.eq.s32.totalorder %s36, 0
      %p156 = por %p154, %p155
      %p157 = scmp.ne.s32.totalorder %s149, %s151
      %p158 = scmp.eq.s32.totalorder %s41, 1
      %p159 = por %p157, %p158
      %p160 = scmp.ne.s32.totalorder %s151, %s152
      %p161 = scmp.eq.s32.totalorder %s41, 0
      %p162 = por %p160, %p161
      %p163 = scmp.ne.s32.totalorder %s151, %s152
      %p164 = scmp.eq.s32.totalorder %s42, 1
      %p165 = por %p163, %p164
      %p167 = scmp.ne.s32.totalorder %s152, %s166
      %p168 = scmp.eq.s32.totalorder %s42, 0
      %p169 = por %p167, %p168
      %s171 = sadd.s32 %s170, 1
      %p174 = scmp.eq.s32.totalorder %s36, 1
      %p175 = scmp.ne.s32.totalorder %s170, %s172
      %p176 = scmp.eq.s32.totalorder %s36, 0
      %p177 = por %p175, %p176
      %p178 = scmp.ne.s32.totalorder %s170, %s172
      %p179 = scmp.eq.s32.totalorder %s41, 1
      %p180 = por %p178, %p179
      %p181 = scmp.ne.s32.totalorder %s172, %s173
      %p182 = scmp.eq.s32.totalorder %s41, 0
      %p183 = por %p181, %p182
      %p184 = scmp.ne.s32.totalorder %s172, %s173
      %p185 = scmp.eq.s32.totalorder %s42, 1
      %p186 = por %p184, %p185
      %p188 = scmp.ne.s32.totalorder %s173, %s187
      %p189 = scmp.eq.s32.totalorder %s42, 0
      %p190 = por %p188, %p189
      %s192 = sadd.s32 %s191, 1
      %p195 = scmp.eq.s32.totalorder %s36, 1
      %p196 = scmp.ne.s32.totalorder %s191, %s193
      %p197 = scmp.eq.s32.totalorder %s36, 0
      %p198 = por %p196, %p197
      %p199 = scmp.ne.s32.totalorder %s191, %s193
      %p200 = scmp.eq.s32.totalorder %s41, 1
      %p201 = por %p199, %p200
      %p202 = scmp.ne.s32.totalorder %s193, %s194
      %p203 = scmp.eq.s32.totalorder %s41, 0
      %p204 = por %p202, %p203
      %p205 = scmp.ne.s32.totalorder %s193, %s194
      %p206 = scmp.eq.s32.totalorder %s42, 1
      %p207 = por %p205, %p206
      %p209 = scmp.ne.s32.totalorder %s194, %s208
      %p210 = scmp.eq.s32.totalorder %s42, 0
      %p211 = por %p209, %p210
      %s213 = sadd.s32 %s212, 1
      %p216 = scmp.eq.s32.totalorder %s36, 1
      %p217 = scmp.ne.s32.totalorder %s212, %s214
      %p218 = scmp.eq.s32.totalorder %s36, 0
      %p219 = por %p217, %p218
      %p220 = scmp.ne.s32.totalorder %s212, %s214
      %p221 = scmp.eq.s32.totalorder %s41, 1
      %p222 = por %p220, %p221
      %p223 = scmp.ne.s32.totalorder %s214, %s215
      %p224 = scmp.eq.s32.totalorder %s41, 0
      %p225 = por %p223, %p224
      %p226 = scmp.ne.s32.totalorder %s214, %s215
      %p227 = scmp.eq.s32.totalorder %s42, 1
      %p228 = por %p226, %p227
      %p230 = scmp.ne.s32.totalorder %s215, %s229
      %p231 = scmp.eq.s32.totalorder %s42, 0
      %p232 = por %p230, %p231
      %s234 = sadd.s32 %s233, 1
      %p237 = scmp.eq.s32.totalorder %s36, 1
      %p238 = scmp.ne.s32.totalorder %s233, %s235
      %p239 = scmp.eq.s32.totalorder %s36, 0
      %p240 = por %p238, %p239
      %p241 = scmp.ne.s32.totalorder %s233, %s235
      %p242 = scmp.eq.s32.totalorder %s41, 1
      %p243 = por %p241, %p242
      %p244 = scmp.ne.s32.totalorder %s235, %s236
      %p245 = scmp.eq.s32.totalorder %s41, 0
      %p246 = por %p244, %p245
      %p247 = scmp.ne.s32.totalorder %s235, %s236
      %p248 = scmp.eq.s32.totalorder %s42, 1
      %p249 = por %p247, %p248
      %p251 = scmp.ne.s32.totalorder %s236, %s250
      %p252 = scmp.eq.s32.totalorder %s42, 0
      %p253 = por %p251, %p252
      %s255 = sadd.s32 %s254, 1
      %p258 = scmp.eq.s32.totalorder %s36, 1
      %p259 = scmp.ne.s32.totalorder %s254, %s256
      %p260 = scmp.eq.s32.totalorder %s36, 0
      %p261 = por %p259, %p260
      %p262 = scmp.ne.s32.totalorder %s254, %s256
      %p263 = scmp.eq.s32.totalorder %s41, 1
      %p264 = por %p262, %p263
      %p265 = scmp.ne.s32.totalorder %s256, %s257
      %p266 = scmp.eq.s32.totalorder %s41, 0
      %p267 = por %p265, %p266
      %p268 = scmp.ne.s32.totalorder %s256, %s257
      %p269 = scmp.eq.s32.totalorder %s42, 1
      %p270 = por %p268, %p269
      %p272 = scmp.ne.s32.totalorder %s257, %s271
      %p273 = scmp.eq.s32.totalorder %s42, 0
      %p274 = por %p272, %p273
      %s276 = sadd.s32 %s275, 1
      %p279 = scmp.eq.s32.totalorder %s36, 1
      %p280 = scmp.ne.s32.totalorder %s275, %s277
      %p281 = scmp.eq.s32.totalorder %s36, 0
      %p282 = por %p280, %p281
      %p283 = scmp.ne.s32.totalorder %s275, %s277
      %p284 = scmp.eq.s32.totalorder %s41, 1
      %p285 = por %p283, %p284
      %p286 = scmp.ne.s32.totalorder %s277, %s278
      %p287 = scmp.eq.s32.totalorder %s41, 0
      %p288 = por %p286, %p287
      %p289 = scmp.ne.s32.totalorder %s277, %s278
      %p290 = scmp.eq.s32.totalorder %s42, 1
      %p291 = por %p289, %p290
      %p293 = scmp.ne.s32.totalorder %s278, %s292
      %p294 = scmp.eq.s32.totalorder %s42, 0
      %p295 = por %p293, %p294
      %s297 = sadd.s32 %s296, 1
      %p300 = scmp.eq.s32.totalorder %s36, 1
      %p301 = scmp.ne.s32.totalorder %s296, %s298
      %p302 = scmp.eq.s32.totalorder %s36, 0
      %p303 = por %p301, %p302
      %p304 = scmp.ne.s32.totalorder %s296, %s298
      %p305 = scmp.eq.s32.totalorder %s41, 1
      %p306 = por %p304, %p305
      %p307 = scmp.ne.s32.totalorder %s298, %s299
      %p308 = scmp.eq.s32.totalorder %s41, 0
      %p309 = por %p307, %p308
      %p310 = scmp.ne.s32.totalorder %s298, %s299
      %p311 = scmp.eq.s32.totalorder %s42, 1
      %p312 = por %p310, %p311
      %p314 = scmp.ne.s32.totalorder %s299, %s313
      %p315 = scmp.eq.s32.totalorder %s42, 0
      %p316 = por %p314, %p315
      %s317 = ssub.s32 %s36, %s43
      %p318 = scmp.eq.s32.totalorder %s317, 0
      %s320 = sadd.s32 %s319, 1
      %s321 = scalar_select %p318, %s319, %s320
      %p324 = pneg %p318
      %p325 = scmp.eq.s32.totalorder %s36, 1
      %p326 = por %p324, %p325
      %p327 = scmp.ne.s32.totalorder %s319, %s322
      %p328 = scmp.eq.s32.totalorder %s36, 0
      %p329 = por %p327, %p328
      %p330 = scmp.ne.s32.totalorder %s319, %s322
      %p331 = scmp.eq.s32.totalorder %s41, 1
      %p332 = por %p330, %p331
      %p333 = scmp.ne.s32.totalorder %s322, %s323
      %p334 = scmp.eq.s32.totalorder %s41, 0
      %p335 = por %p333, %p334
      %p336 = scmp.ne.s32.totalorder %s322, %s323
      %p337 = scmp.eq.s32.totalorder %s42, 1
      %p338 = por %p336, %p337
      %p340 = scmp.ne.s32.totalorder %s323, %s339
      %p341 = scmp.eq.s32.totalorder %s42, 0
      %p342 = por %p340, %p341
      %p343 = scmp.le.s32.totalorder 1, %s36
      %p344 = scmp.lt.s32.totalorder %s36, 3
      %p345 = pnand %p343, %p344
      %p346 = pneg %p345
      // Predicated region
      $region9: #{tpu_custom_call.1} parent=5 // pred_check
        _
      $region10: #{tpu_custom_call.1} parent=5 // pred_check_branch
        %348 = sbr.rel (%p345) target = $region12
      $region11: #{tpu_custom_call.1} parent=5 // pred_region
        %s349 = ssub.s32 %s36, 1
        // Predicated region
        $region13: #{tpu_custom_call.1} parent=11 // pred_check
          %p350 = pneg %p57
        $region14: #{tpu_custom_call.1} parent=11 // pred_check_branch
          %352 = sbr.rel (%p350) target = $region16
        $region15: #{tpu_custom_call.1} parent=11 // pred_region
          _
        $region16: #{tpu_custom_call.1} parent=11 // pred_fallthru
          _
        // Predicated region
        $region17: #{tpu_custom_call.1} parent=11 // pred_check
          %p353 = pneg %p78
        $region18: #{tpu_custom_call.1} parent=11 // pred_check_branch
          %355 = sbr.rel (%p353) target = $region20
        $region19: #{tpu_custom_call.1} parent=11 // pred_region
          _
        $region20: #{tpu_custom_call.1} parent=11 // pred_fallthru
          _
        // Predicated region
        $region21: #{tpu_custom_call.1} parent=11 // pred_check
          %p356 = pneg %p99
        $region22: #{tpu_custom_call.1} parent=11 // pred_check_branch
          %358 = sbr.rel (%p356) target = $region24
        $region23: #{tpu_custom_call.1} parent=11 // pred_region
          _
        $region24: #{tpu_custom_call.1} parent=11 // pred_fallthru
          _
        // Predicated region
        $region25: #{tpu_custom_call.1} parent=11 // pred_check
          %p359 = pneg %p120
        $region26: #{tpu_custom_call.1} parent=11 // pred_check_branch
          %361 = sbr.rel (%p359) target = $region28
        $region27: #{tpu_custom_call.1} parent=11 // pred_region
          _
        $region28: #{tpu_custom_call.1} parent=11 // pred_fallthru
          _
        // Predicated region
        $region29: #{tpu_custom_call.1} parent=11 // pred_check
          %p362 = pneg %p141
        $region30: #{tpu_custom_call.1} parent=11 // pred_check_branch
          %364 = sbr.rel (%p362) target = $region32
        $region31: #{tpu_custom_call.1} parent=11 // pred_region
          %s366 = ssub.s32 2048, 2048
          %367 = vsyncadd [#allocation11], %s366
          %s368 = sshll.u32 [#allocation10], 4
          %s369 = int_to_ptr.vmem [resolvable:$true] %s368
          %374 = dma.hbm_to_vmem [thread:$0]  %s6, 2048, %s369, [#allocation11], 128, 128, 8
        $region32: #{tpu_custom_call.1} parent=11 // pred_fallthru
          _
        // Predicated region
        $region33: #{tpu_custom_call.1} parent=11 // pred_check
          %p375 = pneg %p162
        $region34: #{tpu_custom_call.1} parent=11 // pred_check_branch
          %377 = sbr.rel (%p375) target = $region36
        $region35: #{tpu_custom_call.1} parent=11 // pred_region
          %s379 = ssub.s32 2048, 2048
          %380 = vsyncadd [#allocation13], %s379
          %s381 = sshll.u32 [#allocation12], 4
          %s382 = int_to_ptr.vmem [resolvable:$true] %s381
          %387 = dma.hbm_to_vmem [thread:$0]  %s7, 2048, %s382, [#allocation13], 128, 128, 8
        $region36: #{tpu_custom_call.1} parent=11 // pred_fallthru
          _
        // Predicated region
        $region37: #{tpu_custom_call.1} parent=11 // pred_check
          %p388 = pneg %p183
        $region38: #{tpu_custom_call.1} parent=11 // pred_check_branch
          %390 = sbr.rel (%p388) target = $region40
        $region39: #{tpu_custom_call.1} parent=11 // pred_region
          %s392 = ssub.s32 2048, 2048
          %393 = vsyncadd [#allocation13], %s392
          %s394 = sshll.u32 [#allocation14], 4
          %s395 = int_to_ptr.vmem [resolvable:$true] %s394
          %400 = dma.hbm_to_vmem [thread:$0]  %s8, 2048, %s395, [#allocation13], 128, 128, 8
        $region40: #{tpu_custom_call.1} parent=11 // pred_fallthru
          _
        // Predicated region
        $region41: #{tpu_custom_call.1} parent=11 // pred_check
          %p401 = pneg %p204
        $region42: #{tpu_custom_call.1} parent=11 // pred_check_branch
          %403 = sbr.rel (%p401) target = $region44
        $region43: #{tpu_custom_call.1} parent=11 // pred_region
          _
        $region44: #{tpu_custom_call.1} parent=11 // pred_fallthru
          _
        // Predicated region
        $region45: #{tpu_custom_call.1} parent=11 // pred_check
          %p404 = pneg %p225
        $region46: #{tpu_custom_call.1} parent=11 // pred_check_branch
          %406 = sbr.rel (%p404) target = $region48
        $region47: #{tpu_custom_call.1} parent=11 // pred_region
          %s408 = ssub.s32 2048, 2048
          %409 = vsyncadd [#allocation16], %s408
          %s410 = sshll.u32 [#allocation15], 4
          %s411 = int_to_ptr.vmem [resolvable:$true] %s410
          %416 = dma.hbm_to_vmem [thread:$0]  %s10, 2048, %s411, [#allocation16], 128, 128, 8
        $region48: #{tpu_custom_call.1} parent=11 // pred_fallthru
          _
        // Predicated region
        $region49: #{tpu_custom_call.1} parent=11 // pred_check
          %p417 = pneg %p246
        $region50: #{tpu_custom_call.1} parent=11 // pred_check_branch
          %419 = sbr.rel (%p417) target = $region52
        $region51: #{tpu_custom_call.1} parent=11 // pred_region
          %s421 = ssub.s32 2048, 2048
          %422 = vsyncadd [#allocation16], %s421
          %s423 = sshll.u32 [#allocation17], 4
          %s424 = int_to_ptr.vmem [resolvable:$true] %s423
          %429 = dma.hbm_to_vmem [thread:$0]  %s11, 2048, %s424, [#allocation16], 128, 128, 8
        $region52: #{tpu_custom_call.1} parent=11 // pred_fallthru
          _
        // Predicated region
        $region53: #{tpu_custom_call.1} parent=11 // pred_check
          %p430 = pneg %p267
        $region54: #{tpu_custom_call.1} parent=11 // pred_check_branch
          %432 = sbr.rel (%p430) target = $region56
        $region55: #{tpu_custom_call.1} parent=11 // pred_region
          _
        $region56: #{tpu_custom_call.1} parent=11 // pred_fallthru
          _
        // Predicated region
        $region57: #{tpu_custom_call.1} parent=11 // pred_check
          %p433 = pneg %p288
        $region58: #{tpu_custom_call.1} parent=11 // pred_check_branch
          %435 = sbr.rel (%p433) target = $region60
        $region59: #{tpu_custom_call.1} parent=11 // pred_region
          _
        $region60: #{tpu_custom_call.1} parent=11 // pred_fallthru
          _
        // Predicated region
        $region61: #{tpu_custom_call.1} parent=11 // pred_check
          %p436 = pneg %p309
        $region62: #{tpu_custom_call.1} parent=11 // pred_check_branch
          %438 = sbr.rel (%p436) target = $region64
        $region63: #{tpu_custom_call.1} parent=11 // pred_region
          _
        $region64: #{tpu_custom_call.1} parent=11 // pred_fallthru
          _
      $region12: #{tpu_custom_call.1} parent=5 // pred_fallthru
        _
      %p439 = scmp.lt.s32.totalorder %s36, 2
      // Predicated region
      $region65: #{tpu_custom_call.1} parent=5 // pred_check
        %p440 = pneg %p439
      $region66: #{tpu_custom_call.1} parent=5 // pred_check_branch
        %442 = sbr.rel (%p440) target = $region68
      $region67: #{tpu_custom_call.1} parent=5 // pred_region
        _
      $region68: #{tpu_custom_call.1} parent=5 // pred_fallthru
        _
      %p443 = scmp.le.s32.totalorder 1, %s36
      %p444 = scmp.lt.s32.totalorder %s36, 3
      %p445 = pnand %p443, %p444
      %p446 = pneg %p445
      // Predicated region
      $region69: #{tpu_custom_call.1} parent=5 // pred_check
        _
      $region70: #{tpu_custom_call.1} parent=5 // pred_check_branch
        %448 = sbr.rel (%p445) target = $region72
      $region71: #{tpu_custom_call.1} parent=5 // pred_region
        %s449 = ssub.s32 %s36, 1
        // Predicated region
        $region73: #{tpu_custom_call.1} parent=71 // pred_check
          %p450 = pneg %p141
        $region74: #{tpu_custom_call.1} parent=71 // pred_check_branch
          %452 = sbr.rel (%p450) target = $region76
        $region75: #{tpu_custom_call.1} parent=71 // pred_region
          %453 = dma.done [#allocation11], 2048
        $region76: #{tpu_custom_call.1} parent=71 // pred_fallthru
          _
        // Predicated region
        $region77: #{tpu_custom_call.1} parent=71 // pred_check
          %p454 = pneg %p162
        $region78: #{tpu_custom_call.1} parent=71 // pred_check_branch
          %456 = sbr.rel (%p454) target = $region80
        $region79: #{tpu_custom_call.1} parent=71 // pred_region
          %457 = dma.done [#allocation13], 2048
        $region80: #{tpu_custom_call.1} parent=71 // pred_fallthru
          _
        // Predicated region
        $region81: #{tpu_custom_call.1} parent=71 // pred_check
          %p458 = pneg %p183
        $region82: #{tpu_custom_call.1} parent=71 // pred_check_branch
          %460 = sbr.rel (%p458) target = $region84
        $region83: #{tpu_custom_call.1} parent=71 // pred_region
          %461 = dma.done [#allocation13], 2048
        $region84: #{tpu_custom_call.1} parent=71 // pred_fallthru
          _
        // Predicated region
        $region85: #{tpu_custom_call.1} parent=71 // pred_check
          %p462 = pneg %p225
        $region86: #{tpu_custom_call.1} parent=71 // pred_check_branch
          %464 = sbr.rel (%p462) target = $region88
        $region87: #{tpu_custom_call.1} parent=71 // pred_region
          %465 = dma.done [#allocation16], 2048
        $region88: #{tpu_custom_call.1} parent=71 // pred_fallthru
          _
        // Predicated region
        $region89: #{tpu_custom_call.1} parent=71 // pred_check
          %p466 = pneg %p246
        $region90: #{tpu_custom_call.1} parent=71 // pred_check_branch
          %468 = sbr.rel (%p466) target = $region92
        $region91: #{tpu_custom_call.1} parent=71 // pred_region
          %469 = dma.done [#allocation16], 2048
        $region92: #{tpu_custom_call.1} parent=71 // pred_fallthru
          _
        %p470 = pneg %p57
        %p471 = pneg %p54
        %p472 = pneg %p78
        %p473 = pneg %p75
        %p474 = pneg %p99
        %p475 = pneg %p96
        %p476 = pneg %p120
        %p477 = pneg %p117
        %p478 = pneg %p141
        %p479 = pneg %p138
        %p480 = pneg %p162
        %p481 = pneg %p159
        %p482 = pneg %p183
        %p483 = pneg %p180
        %p484 = pneg %p204
        %p485 = pneg %p201
        %p486 = pneg %p225
        %p487 = pneg %p222
        %p488 = pneg %p246
        %p489 = pneg %p243
        %p490 = pneg %p267
        %p491 = pneg %p264
        %p492 = pneg %p288
        %p493 = pneg %p285
        %p494 = pneg %p309
        %p495 = pneg %p306
        %p496 = pneg %p335
        %p497 = pneg %p332
        %p498 = scmp.lt.s32.totalorder %s41, 1
        %s499 = scalar_select %p498, %s41, 1
        %s500 = smul.addr %s499, 8
        %s501 = scalar_lea.vmem %s15, %s500
        %p502 = scmp.lt.s32.totalorder %s41, 1
        %s503 = scalar_select %p502, %s41, 1
        %s504 = smul.addr %s503, 8
        %s505 = scalar_lea.vmem %s15, %s504
        %s506 = smul.u32 %s41, 8
        %s507 = sld [smem:[#allocation7 + %s506]]
        %s508 = sld [smem:[#allocation8 + %s506]]
        %s509 = scalar_lea.vmem %s2, %s507
        %v510 = vld [vmem:[%s509] sm:$0x1]
        %511 = vst [vmem:[#allocation2] sm:$0x1] %v510
        %s512 = scalar_lea.vmem %s2, %s508
        %v513 = vld [vmem:[%s512] sm:$0x1]
        %514 = vst [vmem:[#allocation3] sm:$0x1] %v513
        %s515 = scalar_lea.vmem %s3, %s507
        %v516 = vld [vmem:[%s515] sm:$0x1]
        %vm517 = vcmask 0
        %518 = vst.msk [vmem:[#allocation4] sm:$0x1] %vm517, %v516
        %s519 = scalar_lea.vmem %s3, %s508
        %v520 = vld [vmem:[%s519] sm:$0x1]
        %521 = vst.msk [vmem:[#allocation5] sm:$0x1] %vm517, %v520
        %s522 = sadd.s32 %s506, 1
        %s523 = sld [smem:[#allocation7 + %s522]]
        %s524 = sld [smem:[#allocation8 + %s522]]
        %s525 = scalar_lea.vmem %s2, %s523
        %v526 = vld [vmem:[%s525] sm:$0x1]
        %527 = vst [vmem:[#allocation2 + $0x1] sm:$0x1] %v526
        %s528 = scalar_lea.vmem %s2, %s524
        %v529 = vld [vmem:[%s528] sm:$0x1]
        %530 = vst [vmem:[#allocation3 + $0x1] sm:$0x1] %v529
        %s531 = scalar_lea.vmem %s3, %s523
        %v532 = vld [vmem:[%s531] sm:$0x1]
        %533 = vst.msk [vmem:[#allocation4 + $0x1] sm:$0x1] %vm517, %v532
        %s534 = scalar_lea.vmem %s3, %s524
        %v535 = vld [vmem:[%s534] sm:$0x1]
        %536 = vst.msk [vmem:[#allocation5 + $0x1] sm:$0x1] %vm517, %v535
        %s537 = sadd.s32 %s506, 2
        %s538 = sld [smem:[#allocation7 + %s537]]
        %s539 = sld [smem:[#allocation8 + %s537]]
        %s540 = scalar_lea.vmem %s2, %s538
        %v541 = vld [vmem:[%s540] sm:$0x1]
        %542 = vst [vmem:[#allocation2 + $0x2] sm:$0x1] %v541
        %s543 = scalar_lea.vmem %s2, %s539
        %v544 = vld [vmem:[%s543] sm:$0x1]
        %545 = vst [vmem:[#allocation3 + $0x2] sm:$0x1] %v544
        %s546 = scalar_lea.vmem %s3, %s538
        %v547 = vld [vmem:[%s546] sm:$0x1]
        %548 = vst.msk [vmem:[#allocation4 + $0x2] sm:$0x1] %vm517, %v547
        %s549 = scalar_lea.vmem %s3, %s539
        %v550 = vld [vmem:[%s549] sm:$0x1]
        %551 = vst.msk [vmem:[#allocation5 + $0x2] sm:$0x1] %vm517, %v550
        %s552 = sadd.s32 %s506, 3
        %s553 = sld [smem:[#allocation7 + %s552]]
        %s554 = sld [smem:[#allocation8 + %s552]]
        %s555 = scalar_lea.vmem %s2, %s553
        %v556 = vld [vmem:[%s555] sm:$0x1]
        %557 = vst [vmem:[#allocation2 + $0x3] sm:$0x1] %v556
        %s558 = scalar_lea.vmem %s2, %s554
        %v559 = vld [vmem:[%s558] sm:$0x1]
        %560 = vst [vmem:[#allocation3 + $0x3] sm:$0x1] %v559
        %s561 = scalar_lea.vmem %s3, %s553
        %v562 = vld [vmem:[%s561] sm:$0x1]
        %563 = vst.msk [vmem:[#allocation4 + $0x3] sm:$0x1] %vm517, %v562
        %s564 = scalar_lea.vmem %s3, %s554
        %v565 = vld [vmem:[%s564] sm:$0x1]
        %566 = vst.msk [vmem:[#allocation5 + $0x3] sm:$0x1] %vm517, %v565
        %s567 = sadd.s32 %s506, 4
        %s568 = sld [smem:[#allocation7 + %s567]]
        %s569 = sld [smem:[#allocation8 + %s567]]
        %s570 = scalar_lea.vmem %s2, %s568
        %v571 = vld [vmem:[%s570] sm:$0x1]
        %572 = vst [vmem:[#allocation2 + $0x4] sm:$0x1] %v571
        %s573 = scalar_lea.vmem %s2, %s569
        %v574 = vld [vmem:[%s573] sm:$0x1]
        %575 = vst [vmem:[#allocation3 + $0x4] sm:$0x1] %v574
        %s576 = scalar_lea.vmem %s3, %s568
        %v577 = vld [vmem:[%s576] sm:$0x1]
        %578 = vst.msk [vmem:[#allocation4 + $0x4] sm:$0x1] %vm517, %v577
        %s579 = scalar_lea.vmem %s3, %s569
        %v580 = vld [vmem:[%s579] sm:$0x1]
        %581 = vst.msk [vmem:[#allocation5 + $0x4] sm:$0x1] %vm517, %v580
        %s582 = sadd.s32 %s506, 5
        %s583 = sld [smem:[#allocation7 + %s582]]
        %s584 = sld [smem:[#allocation8 + %s582]]
        %s585 = scalar_lea.vmem %s2, %s583
        %v586 = vld [vmem:[%s585] sm:$0x1]
        %587 = vst [vmem:[#allocation2 + $0x5] sm:$0x1] %v586
        %s588 = scalar_lea.vmem %s2, %s584
        %v589 = vld [vmem:[%s588] sm:$0x1]
        %590 = vst [vmem:[#allocation3 + $0x5] sm:$0x1] %v589
        %s591 = scalar_lea.vmem %s3, %s583
        %v592 = vld [vmem:[%s591] sm:$0x1]
        %593 = vst.msk [vmem:[#allocation4 + $0x5] sm:$0x1] %vm517, %v592
        %s594 = scalar_lea.vmem %s3, %s584
        %v595 = vld [vmem:[%s594] sm:$0x1]
        %596 = vst.msk [vmem:[#allocation5 + $0x5] sm:$0x1] %vm517, %v595
        %s597 = sadd.s32 %s506, 6
        %s598 = sld [smem:[#allocation7 + %s597]]
        %s599 = sld [smem:[#allocation8 + %s597]]
        %s600 = scalar_lea.vmem %s2, %s598
        %v601 = vld [vmem:[%s600] sm:$0x1]
        %602 = vst [vmem:[#allocation2 + $0x6] sm:$0x1] %v601
        %s603 = scalar_lea.vmem %s2, %s599
        %v604 = vld [vmem:[%s603] sm:$0x1]
        %605 = vst [vmem:[#allocation3 + $0x6] sm:$0x1] %v604
        %s606 = scalar_lea.vmem %s3, %s598
        %v607 = vld [vmem:[%s606] sm:$0x1]
        %608 = vst.msk [vmem:[#allocation4 + $0x6] sm:$0x1] %vm517, %v607
        %s609 = scalar_lea.vmem %s3, %s599
        %v610 = vld [vmem:[%s609] sm:$0x1]
        %611 = vst.msk [vmem:[#allocation5 + $0x6] sm:$0x1] %vm517, %v610
        %s612 = sadd.s32 %s506, 7
        %s613 = sld [smem:[#allocation7 + %s612]]
        %s614 = sld [smem:[#allocation8 + %s612]]
        %s615 = scalar_lea.vmem %s2, %s613
        %v616 = vld [vmem:[%s615] sm:$0x1]
        %617 = vst [vmem:[#allocation2 + $0x7] sm:$0x1] %v616
        %s618 = scalar_lea.vmem %s2, %s614
        %v619 = vld [vmem:[%s618] sm:$0x1]
        %620 = vst [vmem:[#allocation3 + $0x7] sm:$0x1] %v619
        %s621 = scalar_lea.vmem %s3, %s613
        %v622 = vld [vmem:[%s621] sm:$0x1]
        %623 = vst.msk [vmem:[#allocation4 + $0x7] sm:$0x1] %vm517, %v622
        %s624 = scalar_lea.vmem %s3, %s614
        %v625 = vld [vmem:[%s624] sm:$0x1]
        %626 = vst.msk [vmem:[#allocation5 + $0x7] sm:$0x1] %vm517, %v625
        %v627 = vld [vmem:[%s4] sm:$0x1]
        %v628 = vld [vmem:[%s5] sm:$0x1]
        %v629 = vld [vmem:[#allocation2] sm:$0xff]
        %v630 = vld [vmem:[#allocation3] sm:$0xff]
        %v631 = vld [vmem:[#allocation4] sm:$0xff]
        %633 = vset.pattern.permute.xlu0 0
        %634 = vperm.xlu0 %633, %v631
        %v635 = vpop.permute.xlu0 %634
        %v638 = vlaneseq
        %v639 = vshrl.u32 %v638, 7
        %v640 = vsub.s32 0, %v639
        %v641 = vrot.slane %v627, %v640
        %v643 = vmul.f32 %v635, %v641
        %v645 = vlaneseq
        %v646 = vshrl.u32 %v645, 7
        %v647 = vsub.s32 0, %v646
        %v648 = vrot.slane %v628, %v647
        %v650 = vadd.f32 %v643, %v648
        %v651 = vand.u32 2147483647, %v650
        %vm652 = vcmp.le.f32.partialorder %v651, 0.7853982
        %vm653 = vcmp.lt.s32.totalorder %v650, 0
        %v654 = vand.u32 %v650, 2139095040
        %v655 = vshrl.u32 %v654, 23
        %v656 = vsub.s32 %v655, 127
        %v657 = vand.u32 2147483647, %v650
        %v658 = vand.u32 %v657, 8388607
        %v659 = vor.u32 %v658, 8388608
        %v660 = vsub.s32 0, %v659
        %v661 = vadd.s32 %v656, 1
        %vm662 = vcmp.gt.s32.totalorder %v661, 0
        %v663 = vsel %vm662, %v661, 0
        %v664 = vshrl.u32 %v663, 5
        %v665 = vand.u32 %v663, 31
        %v666 = vsub.s32 32, %v665
        %v667 = vshrl.u32 683565275, %v666
        %v668 = vshll.u32 683565275, %v665
        %v669 = vshrl.u32 2475754826, %v666
        %v670 = vor.u32 %v668, %v669
        %v671 = vshll.u32 2475754826, %v665
        %v672 = vshrl.u32 2131351028, %v666
        %v673 = vor.u32 %v671, %v672
        %v674 = vshll.u32 2131351028, %v665
        %v675 = vshrl.u32 2102212464, %v666
        %v676 = vor.u32 %v674, %v675
        %v677 = vshll.u32 2102212464, %v665
        %v678 = vshrl.u32 920167782, %v666
        %v679 = vor.u32 %v677, %v678
        %v680 = vshll.u32 920167782, %v665
        %v681 = vshrl.u32 1326507024, %v666
        %v682 = vor.u32 %v680, %v681
        %vm683 = vcmp.lt.s32.totalorder %v664, 1
        %vm684 = vcmp.lt.s32.totalorder %v664, 2
        %vm685 = vcmp.lt.s32.totalorder %v664, 3
        %vm686 = vcmp.lt.s32.totalorder %v664, 4
        %v687 = vsel %vm683, %v667, %v670
        %v688 = vsel %vm686, %v676, 2102212464
        %v689 = vsel %vm685, %v673, %v688
        %v690 = vsel %vm684, %v687, %v689
        %v691 = vsel %vm683, %v670, %v673
        %v692 = vsel %vm686, %v679, 920167782
        %v693 = vsel %vm685, %v676, %v692
        %v694 = vsel %vm684, %v691, %v693
        %v695 = vsel %vm683, %v673, %v676
        %v696 = vsel %vm686, %v682, 1326507024
        %v697 = vsel %vm685, %v679, %v696
        %v698 = vsel %vm684, %v695, %v697
        %v699 = vshll.u32 %v659, 8
        %v700 = vmul.u32.u64.compose %v699, %v698
        %v701 = vextract.low.u32 %v700
        %v702 = vextract.high.u32 %v700
        %v703 = vmul.u32.u64.compose %v699, %v694
        %v704 = vextract.low.u32 %v703
        %v705 = vextract.high.u32 %v703
        %v706 = vmul.u32 %v699, %v690
        %v707 = vadd.s32 %v702, %v704
        %vm708 = vc.u32 %v702, %v704
        %v709 = vadd.s32 %v705, 1
        %v710 = vsel %vm708, %v709, %v705
        %v711 = vadd.s32 %v706, %v710
        %v712 = vadd.s32 %v711, 536870912
        %v713 = vshrl.u32 %v712, 30
        %v714 = vshll.u32 %v713, 30
        %v715 = vsub.s32 %v711, %v714
        %vm716 = vcmp.lt.s32.totalorder %v715, 0
        %v717 = vsub.s32 0, %v715
        %v718 = vsel %vm716, %v717, %v715
        %v719 = vclz %v718
        %v720 = vsub.s32 %v719, 2
        %vm721 = vcmp.gt.s32.totalorder 0, %v720
        %v722 = vsel %vm721, 0, %v720
        %v723 = vsub.s32 32, %v722
        %v724 = vshll.u32 %v715, %v722
        %v725 = vshrl.u32 %v707, %v723
        %v726 = vor.u32 %v724, %v725
        %v727 = vsub.s32 4294967266, %v722
        %v728 = vadd.s32 %v727, 127
        %v729 = vshll.u32 %v728, 23
        %v730 = vor.u32 4788187, %v729
        %v731 = vand.u32 2147483647, %v730
        %v733 = vcvt.s32.f32 %v726
        %v734 = vmul.f32 %v733, %v731
        %v735 = vxor.u32 %v734, 2147483648
        %v736 = vsel %vm653, %v735, %v734
        %v737 = vsub.s32 4, %v713
        %v738 = vsel %vm653, %v737, %v713
        %v739 = vsel %vm652, %v650, %v736
        %v740 = vsel %vm652, 0, %v738
        %v741 = vcosq.f32.pop %v739
        %v742 = vsinq.f32.pop %v739
        %vm743 = vweird.f32 %v650
        %v744 = vand.u32 %v740, 3
        %vm745 = vcmp.lt.s32.totalorder %v744, 2
        %vm746 = vcmp.eq.s32.totalorder %v744, 0
        %v747 = vxor.u32 %v742, 2147483648
        %v748 = vsel %vm746, %v741, %v747
        %vm749 = vcmp.eq.s32.totalorder %v744, 2
        %v750 = vxor.u32 %v741, 2147483648
        %v751 = vsel %vm749, %v750, %v742
        %v752 = vsel %vm745, %v748, %v751
        %v753 = vsel %vm743, nan, %v752
        %v754 = vadd.f32 %v629, %v753
        %v755 = vld [vmem:[#allocation5] sm:$0xff]
        %757 = vset.pattern.permute.xlu0 0
        %758 = vperm.xlu0 %757, %v755
        %v759 = vpop.permute.xlu0 %758
        %v761 = vmul.f32 %v759, %v641
        %v762 = vadd.f32 %v761, %v648
        %v763 = vand.u32 2147483647, %v762
        %vm764 = vcmp.le.f32.partialorder %v763, 0.7853982
        %vm765 = vcmp.lt.s32.totalorder %v762, 0
        %v766 = vand.u32 %v762, 2139095040
        %v767 = vshrl.u32 %v766, 23
        %v768 = vsub.s32 %v767, 127
        %v769 = vand.u32 2147483647, %v762
        %v770 = vand.u32 %v769, 8388607
        %v771 = vor.u32 %v770, 8388608
        %v772 = vsub.s32 0, %v771
        %v773 = vadd.s32 %v768, 1
        %vm774 = vcmp.gt.s32.totalorder %v773, 0
        %v775 = vsel %vm774, %v773, 0
        %v776 = vshrl.u32 %v775, 5
        %v777 = vand.u32 %v775, 31
        %v778 = vsub.s32 32, %v777
        %v779 = vshrl.u32 683565275, %v778
        %v780 = vshll.u32 683565275, %v777
        %v781 = vshrl.u32 2475754826, %v778
        %v782 = vor.u32 %v780, %v781
        %v783 = vshll.u32 2475754826, %v777
        %v784 = vshrl.u32 2131351028, %v778
        %v785 = vor.u32 %v783, %v784
        %v786 = vshll.u32 2131351028, %v777
        %v787 = vshrl.u32 2102212464, %v778
        %v788 = vor.u32 %v786, %v787
        %v789 = vshll.u32 2102212464, %v777
        %v790 = vshrl.u32 920167782, %v778
        %v791 = vor.u32 %v789, %v790
        %v792 = vshll.u32 920167782, %v777
        %v793 = vshrl.u32 1326507024, %v778
        %v794 = vor.u32 %v792, %v793
        %vm795 = vcmp.lt.s32.totalorder %v776, 1
        %vm796 = vcmp.lt.s32.totalorder %v776, 2
        %vm797 = vcmp.lt.s32.totalorder %v776, 3
        %vm798 = vcmp.lt.s32.totalorder %v776, 4
        %v799 = vsel %vm795, %v779, %v782
        %v800 = vsel %vm798, %v788, 2102212464
        %v801 = vsel %vm797, %v785, %v800
        %v802 = vsel %vm796, %v799, %v801
        %v803 = vsel %vm795, %v782, %v785
        %v804 = vsel %vm798, %v791, 920167782
        %v805 = vsel %vm797, %v788, %v804
        %v806 = vsel %vm796, %v803, %v805
        %v807 = vsel %vm795, %v785, %v788
        %v808 = vsel %vm798, %v794, 1326507024
        %v809 = vsel %vm797, %v791, %v808
        %v810 = vsel %vm796, %v807, %v809
        %v811 = vshll.u32 %v771, 8
        %v812 = vmul.u32.u64.compose %v811, %v810
        %v813 = vextract.low.u32 %v812
        %v814 = vextract.high.u32 %v812
        %v815 = vmul.u32.u64.compose %v811, %v806
        %v816 = vextract.low.u32 %v815
        %v817 = vextract.high.u32 %v815
        %v818 = vmul.u32 %v811, %v802
        %v819 = vadd.s32 %v814, %v816
        %vm820 = vc.u32 %v814, %v816
        %v821 = vadd.s32 %v817, 1
        %v822 = vsel %vm820, %v821, %v817
        %v823 = vadd.s32 %v818, %v822
        %v824 = vadd.s32 %v823, 536870912
        %v825 = vshrl.u32 %v824, 30
        %v826 = vshll.u32 %v825, 30
        %v827 = vsub.s32 %v823, %v826
        %vm828 = vcmp.lt.s32.totalorder %v827, 0
        %v829 = vsub.s32 0, %v827
        %v830 = vsel %vm828, %v829, %v827
        %v831 = vclz %v830
        %v832 = vsub.s32 %v831, 2
        %vm833 = vcmp.gt.s32.totalorder 0, %v832
        %v834 = vsel %vm833, 0, %v832
        %v835 = vsub.s32 32, %v834
        %v836 = vshll.u32 %v827, %v834
        %v837 = vshrl.u32 %v819, %v835
        %v838 = vor.u32 %v836, %v837
        %v839 = vsub.s32 4294967266, %v834
        %v840 = vadd.s32 %v839, 127
        %v841 = vshll.u32 %v840, 23
        %v842 = vor.u32 4788187, %v841
        %v843 = vand.u32 2147483647, %v842
        %v845 = vcvt.s32.f32 %v838
        %v846 = vmul.f32 %v845, %v843
        %v847 = vxor.u32 %v846, 2147483648
        %v848 = vsel %vm765, %v847, %v846
        %v849 = vsub.s32 4, %v825
        %v850 = vsel %vm765, %v849, %v825
        %v851 = vsel %vm764, %v762, %v848
        %v852 = vsel %vm764, 0, %v850
        %v853 = vcosq.f32.pop %v851
        %v854 = vsinq.f32.pop %v851
        %vm855 = vweird.f32 %v762
        %v856 = vand.u32 %v852, 3
        %vm857 = vcmp.lt.s32.totalorder %v856, 2
        %vm858 = vcmp.eq.s32.totalorder %v856, 0
        %v859 = vxor.u32 %v854, 2147483648
        %v860 = vsel %vm858, %v853, %v859
        %vm861 = vcmp.eq.s32.totalorder %v856, 2
        %v862 = vxor.u32 %v853, 2147483648
        %v863 = vsel %vm861, %v862, %v854
        %v864 = vsel %vm857, %v860, %v863
        %v865 = vsel %vm855, nan, %v864
        %v866 = vadd.f32 %v630, %v865
        %v867 = vld [vmem:[#allocation10] sm:$0xff]
        %v868 = vld [vmem:[#allocation10 + $0x8] sm:$0xff]
        %v869 = vld [vmem:[#allocation10 + $0x10] sm:$0xff]
        %v870 = vld [vmem:[#allocation10 + $0x18] sm:$0xff]
        %v871 = vld [vmem:[#allocation10 + $0x20] sm:$0xff]
        %v872 = vld [vmem:[#allocation10 + $0x28] sm:$0xff]
        %v873 = vld [vmem:[#allocation10 + $0x30] sm:$0xff]
        %v874 = vld [vmem:[#allocation10 + $0x38] sm:$0xff]
        %v875 = vld [vmem:[#allocation10 + $0x40] sm:$0xff]
        %v876 = vld [vmem:[#allocation10 + $0x48] sm:$0xff]
        %v877 = vld [vmem:[#allocation10 + $0x50] sm:$0xff]
        %v878 = vld [vmem:[#allocation10 + $0x58] sm:$0xff]
        %v879 = vld [vmem:[#allocation10 + $0x60] sm:$0xff]
        %v880 = vld [vmem:[#allocation10 + $0x68] sm:$0xff]
        %v881 = vld [vmem:[#allocation10 + $0x70] sm:$0xff]
        %v882 = vld [vmem:[#allocation10 + $0x78] sm:$0xff]
        %883 = vmatprep.subr.mxu0 0.0
        %884 = vmatpush1.msra.mxu0 %v867
        %885 = vmatprep.subr.mxu0 0.0
        %886 = vmatpush1.msra.mxu0 %v868
        %887 = vmatprep.subr.mxu0 0.0
        %888 = vmatpush1.msra.mxu0 %v869
        %889 = vmatprep.subr.mxu0 0.0
        %890 = vmatpush1.msra.mxu0 %v870
        %891 = vmatprep.subr.mxu0 0.0
        %892 = vmatpush1.msra.mxu0 %v871
        %893 = vmatprep.subr.mxu0 0.0
        %894 = vmatpush1.msra.mxu0 %v872
        %895 = vmatprep.subr.mxu0 0.0
        %896 = vmatpush1.msra.mxu0 %v873
        %897 = vmatprep.subr.mxu0 0.0
        %898 = vmatpush1.msra.mxu0 %v874
        %899 = vmatprep.subr.mxu0 0.0
        %900 = vmatpush1.msra.mxu0 %v875
        %901 = vmatprep.subr.mxu0 0.0
        %902 = vmatpush1.msra.mxu0 %v876
        %903 = vmatprep.subr.mxu0 0.0
        %904 = vmatpush1.msra.mxu0 %v877
        %905 = vmatprep.subr.mxu0 0.0
        %906 = vmatpush1.msra.mxu0 %v878
        %907 = vmatprep.subr.mxu0 0.0
        %908 = vmatpush1.msra.mxu0 %v879
        %909 = vmatprep.subr.mxu0 0.0
        %910 = vmatpush1.msra.mxu0 %v880
        %911 = vmatprep.subr.mxu0 0.0
        %912 = vmatpush1.msra.mxu0 %v881
        %913 = vmatprep.subr.mxu0 0.0
        %914 = vmatpush1.msra.mxu0 %v882
        %915 = vmatprep.subr.mxu0 0.0
        %916 = vmatpush1.msra.mxu0 0.0
        %917 = vmatprep.subr.mxu0 0.0
        %918 = vmatpush1.msra.mxu0 0.0
        %919 = vmatprep.subr.mxu0 0.0
        %920 = vmatpush1.msra.mxu0 0.0
        %921 = vmatprep.subr.mxu0 0.0
        %922 = vmatpush1.msra.mxu0 0.0
        %923 = vmatprep.subr.mxu0 0.0
        %924 = vmatpush1.msra.mxu0 0.0
        %925 = vmatprep.subr.mxu0 0.0
        %926 = vmatpush1.msra.mxu0 0.0
        %927 = vmatprep.subr.mxu0 0.0
        %928 = vmatpush1.msra.mxu0 0.0
        %929 = vmatprep.subr.mxu0 0.0
        %930 = vmatpush1.msra.mxu0 0.0
        %931 = vmatprep.subr.mxu0 0.0
        %932 = vmatpush1.msra.mxu0 0.0
        %933 = vmatprep.subr.mxu0 0.0
        %934 = vmatpush1.msra.mxu0 0.0
        %935 = vmatprep.subr.mxu0 0.0
        %936 = vmatpush1.msra.mxu0 0.0
        %937 = vmatprep.subr.mxu0 0.0
        %938 = vmatpush1.msra.mxu0 0.0
        %939 = vmatprep.subr.mxu0 0.0
        %940 = vmatpush1.msra.mxu0 0.0
        %941 = vmatprep.subr.mxu0 0.0
        %942 = vmatpush1.msra.mxu0 0.0
        %943 = vmatprep.subr.mxu0 0.0
        %944 = vmatpush1.msra.mxu0 0.0
        %945 = vmatprep.subr.mxu0 0.0
        %946 = vmatpush1.msra.mxu0 0.0
        %947 = vmatprep.mubr.f32.mxu0 0.0
        %948 = vmatmul.mubr.f32.gmra.mrb[0].mxu0 %v630
        %v949 = vpop.f32.mrb[0].mxu0
        %v950 = vadd.f32 0.0, %v949
        %v951 = vpop.f32.mrb[0].mxu0
        %952 = vdwg.mxu0
        %v953 = vtanh.pop %v950
        %v954 = vld [vmem:[#allocation12] sm:$0xff]
        %v955 = vld [vmem:[#allocation12 + $0x8] sm:$0xff]
        %v956 = vld [vmem:[#allocation12 + $0x10] sm:$0xff]
        %v957 = vld [vmem:[#allocation12 + $0x18] sm:$0xff]
        %v958 = vld [vmem:[#allocation12 + $0x20] sm:$0xff]
        %v959 = vld [vmem:[#allocation12 + $0x28] sm:$0xff]
        %v960 = vld [vmem:[#allocation12 + $0x30] sm:$0xff]
        %v961 = vld [vmem:[#allocation12 + $0x38] sm:$0xff]
        %v962 = vld [vmem:[#allocation12 + $0x40] sm:$0xff]
        %v963 = vld [vmem:[#allocation12 + $0x48] sm:$0xff]
        %v964 = vld [vmem:[#allocation12 + $0x50] sm:$0xff]
        %v965 = vld [vmem:[#allocation12 + $0x58] sm:$0xff]
        %v966 = vld [vmem:[#allocation12 + $0x60] sm:$0xff]
        %v967 = vld [vmem:[#allocation12 + $0x68] sm:$0xff]
        %v968 = vld [vmem:[#allocation12 + $0x70] sm:$0xff]
        %v969 = vld [vmem:[#allocation12 + $0x78] sm:$0xff]
        %v970 = vld [vmem:[#allocation14] sm:$0xff]
        %v971 = vld [vmem:[#allocation14 + $0x8] sm:$0xff]
        %v972 = vld [vmem:[#allocation14 + $0x10] sm:$0xff]
        %v973 = vld [vmem:[#allocation14 + $0x18] sm:$0xff]
        %v974 = vld [vmem:[#allocation14 + $0x20] sm:$0xff]
        %v975 = vld [vmem:[#allocation14 + $0x28] sm:$0xff]
        %v976 = vld [vmem:[#allocation14 + $0x30] sm:$0xff]
        %v977 = vld [vmem:[#allocation14 + $0x38] sm:$0xff]
        %v978 = vld [vmem:[#allocation14 + $0x40] sm:$0xff]
        %v979 = vld [vmem:[#allocation14 + $0x48] sm:$0xff]
        %v980 = vld [vmem:[#allocation14 + $0x50] sm:$0xff]
        %v981 = vld [vmem:[#allocation14 + $0x58] sm:$0xff]
        %v982 = vld [vmem:[#allocation14 + $0x60] sm:$0xff]
        %v983 = vld [vmem:[#allocation14 + $0x68] sm:$0xff]
        %v984 = vld [vmem:[#allocation14 + $0x70] sm:$0xff]
        %v985 = vld [vmem:[#allocation14 + $0x78] sm:$0xff]
        %986 = vmatprep.subr.mxu0 0.0
        %987 = vmatpush1.msra.mxu0 %v970
        %988 = vmatprep.subr.mxu0 0.0
        %989 = vmatpush1.msra.mxu0 %v971
        %990 = vmatprep.subr.mxu0 0.0
        %991 = vmatpush1.msra.mxu0 %v972
        %992 = vmatprep.subr.mxu0 0.0
        %993 = vmatpush1.msra.mxu0 %v973
        %994 = vmatprep.subr.mxu0 0.0
        %995 = vmatpush1.msra.mxu0 %v974
        %996 = vmatprep.subr.mxu0 0.0
        %997 = vmatpush1.msra.mxu0 %v975
        %998 = vmatprep.subr.mxu0 0.0
        %999 = vmatpush1.msra.mxu0 %v976
        %1000 = vmatprep.subr.mxu0 0.0
        %1001 = vmatpush1.msra.mxu0 %v977
        %1002 = vmatprep.subr.mxu0 0.0
        %1003 = vmatpush1.msra.mxu0 %v978
        %1004 = vmatprep.subr.mxu0 0.0
        %1005 = vmatpush1.msra.mxu0 %v979
        %1006 = vmatprep.subr.mxu0 0.0
        %1007 = vmatpush1.msra.mxu0 %v980
        %1008 = vmatprep.subr.mxu0 0.0
        %1009 = vmatpush1.msra.mxu0 %v981
        %1010 = vmatprep.subr.mxu0 0.0
        %1011 = vmatpush1.msra.mxu0 %v982
        %1012 = vmatprep.subr.mxu0 0.0
        %1013 = vmatpush1.msra.mxu0 %v983
        %1014 = vmatprep.subr.mxu0 0.0
        %1015 = vmatpush1.msra.mxu0 %v984
        %1016 = vmatprep.subr.mxu0 0.0
        %1017 = vmatpush1.msra.mxu0 %v985
        %1018 = vmatprep.subr.mxu0 0.0
        %1019 = vmatpush1.msra.mxu0 0.0
        %1020 = vmatprep.subr.mxu0 0.0
        %1021 = vmatpush1.msra.mxu0 0.0
        %1022 = vmatprep.subr.mxu0 0.0
        %1023 = vmatpush1.msra.mxu0 0.0
        %1024 = vmatprep.subr.mxu0 0.0
        %1025 = vmatpush1.msra.mxu0 0.0
        %1026 = vmatprep.subr.mxu0 0.0
        %1027 = vmatpush1.msra.mxu0 0.0
        %1028 = vmatprep.subr.mxu0 0.0
        %1029 = vmatpush1.msra.mxu0 0.0
        %1030 = vmatprep.subr.mxu0 0.0
        %1031 = vmatpush1.msra.mxu0 0.0
        %1032 = vmatprep.subr.mxu0 0.0
        %1033 = vmatpush1.msra.mxu0 0.0
        %1034 = vmatprep.subr.mxu0 0.0
        %1035 = vmatpush1.msra.mxu0 0.0
        %1036 = vmatprep.subr.mxu0 0.0
        %1037 = vmatpush1.msra.mxu0 0.0
        %1038 = vmatprep.subr.mxu0 0.0
        %1039 = vmatpush1.msra.mxu0 0.0
        %1040 = vmatprep.subr.mxu0 0.0
        %1041 = vmatpush1.msra.mxu0 0.0
        %1042 = vmatprep.subr.mxu0 0.0
        %1043 = vmatpush1.msra.mxu0 0.0
        %1044 = vmatprep.subr.mxu0 0.0
        %1045 = vmatpush1.msra.mxu0 0.0
        %1046 = vmatprep.subr.mxu0 0.0
        %1047 = vmatpush1.msra.mxu0 0.0
        %1048 = vmatprep.subr.mxu0 0.0
        %1049 = vmatpush1.msra.mxu0 0.0
        %1050 = vmatprep.mubr.f32.mxu0 0.0
        %1051 = vmatmul.mubr.f32.gmra.mrb[0].mxu0 %v953
        %v1052 = vpop.f32.mrb[0].mxu0
        %v1053 = vadd.f32 0.0, %v1052
        %v1054 = vpop.f32.mrb[0].mxu0
        %1055 = vdwg.mxu0
        %1056 = vmatprep.subr.mxu0 0.0
        %1057 = vmatpush1.msra.mxu0 %v954
        %1058 = vmatprep.subr.mxu0 0.0
        %1059 = vmatpush1.msra.mxu0 %v955
        %1060 = vmatprep.subr.mxu0 0.0
        %1061 = vmatpush1.msra.mxu0 %v956
        %1062 = vmatprep.subr.mxu0 0.0
        %1063 = vmatpush1.msra.mxu0 %v957
        %1064 = vmatprep.subr.mxu0 0.0
        %1065 = vmatpush1.msra.mxu0 %v958
        %1066 = vmatprep.subr.mxu0 0.0
        %1067 = vmatpush1.msra.mxu0 %v959
        %1068 = vmatprep.subr.mxu0 0.0
        %1069 = vmatpush1.msra.mxu0 %v960
        %1070 = vmatprep.subr.mxu0 0.0
        %1071 = vmatpush1.msra.mxu0 %v961
        %1072 = vmatprep.subr.mxu0 0.0
        %1073 = vmatpush1.msra.mxu0 %v962
        %1074 = vmatprep.subr.mxu0 0.0
        %1075 = vmatpush1.msra.mxu0 %v963
        %1076 = vmatprep.subr.mxu0 0.0
        %1077 = vmatpush1.msra.mxu0 %v964
        %1078 = vmatprep.subr.mxu0 0.0
        %1079 = vmatpush1.msra.mxu0 %v965
        %1080 = vmatprep.subr.mxu0 0.0
        %1081 = vmatpush1.msra.mxu0 %v966
        %1082 = vmatprep.subr.mxu0 0.0
        %1083 = vmatpush1.msra.mxu0 %v967
        %1084 = vmatprep.subr.mxu0 0.0
        %1085 = vmatpush1.msra.mxu0 %v968
        %1086 = vmatprep.subr.mxu0 0.0
        %1087 = vmatpush1.msra.mxu0 %v969
        %1088 = vmatprep.subr.mxu0 0.0
        %1089 = vmatpush1.msra.mxu0 0.0
        %1090 = vmatprep.subr.mxu0 0.0
        %1091 = vmatpush1.msra.mxu0 0.0
        %1092 = vmatprep.subr.mxu0 0.0
        %1093 = vmatpush1.msra.mxu0 0.0
        %1094 = vmatprep.subr.mxu0 0.0
        %1095 = vmatpush1.msra.mxu0 0.0
        %1096 = vmatprep.subr.mxu0 0.0
        %1097 = vmatpush1.msra.mxu0 0.0
        %1098 = vmatprep.subr.mxu0 0.0
        %1099 = vmatpush1.msra.mxu0 0.0
        %1100 = vmatprep.subr.mxu0 0.0
        %1101 = vmatpush1.msra.mxu0 0.0
        %1102 = vmatprep.subr.mxu0 0.0
        %1103 = vmatpush1.msra.mxu0 0.0
        %1104 = vmatprep.subr.mxu0 0.0
        %1105 = vmatpush1.msra.mxu0 0.0
        %1106 = vmatprep.subr.mxu0 0.0
        %1107 = vmatpush1.msra.mxu0 0.0
        %1108 = vmatprep.subr.mxu0 0.0
        %1109 = vmatpush1.msra.mxu0 0.0
        %1110 = vmatprep.subr.mxu0 0.0
        %1111 = vmatpush1.msra.mxu0 0.0
        %1112 = vmatprep.subr.mxu0 0.0
        %1113 = vmatpush1.msra.mxu0 0.0
        %1114 = vmatprep.subr.mxu0 0.0
        %1115 = vmatpush1.msra.mxu0 0.0
        %1116 = vmatprep.subr.mxu0 0.0
        %1117 = vmatpush1.msra.mxu0 0.0
        %1118 = vmatprep.subr.mxu0 0.0
        %1119 = vmatpush1.msra.mxu0 0.0
        %1120 = vmatprep.mubr.f32.mxu0 0.0
        %1121 = vmatmul.mubr.f32.gmra.mrb[0].mxu0 %v866
        %v1122 = vpop.f32.mrb[0].mxu0
        %v1123 = vadd.f32 %v1053, %v1122
        %v1124 = vpop.f32.mrb[0].mxu0
        %1125 = vdwg.mxu0
        %v1126 = vld [vmem:[%s9] sm:$0x1]
        %v1128 = vlaneseq
        %v1129 = vshrl.u32 %v1128, 7
        %v1130 = vsub.s32 0, %v1129
        %v1131 = vrot.slane %v1126, %v1130
        %v1133 = vadd.f32 %v1123, %v1131
        %v1134 = vld [vmem:[#allocation15] sm:$0xff]
        %v1135 = vld [vmem:[#allocation15 + $0x8] sm:$0xff]
        %v1136 = vld [vmem:[#allocation15 + $0x10] sm:$0xff]
        %v1137 = vld [vmem:[#allocation15 + $0x18] sm:$0xff]
        %v1138 = vld [vmem:[#allocation15 + $0x20] sm:$0xff]
        %v1139 = vld [vmem:[#allocation15 + $0x28] sm:$0xff]
        %v1140 = vld [vmem:[#allocation15 + $0x30] sm:$0xff]
        %v1141 = vld [vmem:[#allocation15 + $0x38] sm:$0xff]
        %v1142 = vld [vmem:[#allocation15 + $0x40] sm:$0xff]
        %v1143 = vld [vmem:[#allocation15 + $0x48] sm:$0xff]
        %v1144 = vld [vmem:[#allocation15 + $0x50] sm:$0xff]
        %v1145 = vld [vmem:[#allocation15 + $0x58] sm:$0xff]
        %v1146 = vld [vmem:[#allocation15 + $0x60] sm:$0xff]
        %v1147 = vld [vmem:[#allocation15 + $0x68] sm:$0xff]
        %v1148 = vld [vmem:[#allocation15 + $0x70] sm:$0xff]
        %v1149 = vld [vmem:[#allocation15 + $0x78] sm:$0xff]
        %v1150 = vld [vmem:[#allocation17] sm:$0xff]
        %v1151 = vld [vmem:[#allocation17 + $0x8] sm:$0xff]
        %v1152 = vld [vmem:[#allocation17 + $0x10] sm:$0xff]
        %v1153 = vld [vmem:[#allocation17 + $0x18] sm:$0xff]
        %v1154 = vld [vmem:[#allocation17 + $0x20] sm:$0xff]
        %v1155 = vld [vmem:[#allocation17 + $0x28] sm:$0xff]
        %v1156 = vld [vmem:[#allocation17 + $0x30] sm:$0xff]
        %v1157 = vld [vmem:[#allocation17 + $0x38] sm:$0xff]
        %v1158 = vld [vmem:[#allocation17 + $0x40] sm:$0xff]
        %v1159 = vld [vmem:[#allocation17 + $0x48] sm:$0xff]
        %v1160 = vld [vmem:[#allocation17 + $0x50] sm:$0xff]
        %v1161 = vld [vmem:[#allocation17 + $0x58] sm:$0xff]
        %v1162 = vld [vmem:[#allocation17 + $0x60] sm:$0xff]
        %v1163 = vld [vmem:[#allocation17 + $0x68] sm:$0xff]
        %v1164 = vld [vmem:[#allocation17 + $0x70] sm:$0xff]
        %v1165 = vld [vmem:[#allocation17 + $0x78] sm:$0xff]
        %1166 = vmatprep.subr.mxu0 0.0
        %1167 = vmatpush1.msra.mxu0 %v1150
        %1168 = vmatprep.subr.mxu0 0.0
        %1169 = vmatpush1.msra.mxu0 %v1151
        %1170 = vmatprep.subr.mxu0 0.0
        %1171 = vmatpush1.msra.mxu0 %v1152
        %1172 = vmatprep.subr.mxu0 0.0
        %1173 = vmatpush1.msra.mxu0 %v1153
        %1174 = vmatprep.subr.mxu0 0.0
        %1175 = vmatpush1.msra.mxu0 %v1154
        %1176 = vmatprep.subr.mxu0 0.0
        %1177 = vmatpush1.msra.mxu0 %v1155
        %1178 = vmatprep.subr.mxu0 0.0
        %1179 = vmatpush1.msra.mxu0 %v1156
        %1180 = vmatprep.subr.mxu0 0.0
        %1181 = vmatpush1.msra.mxu0 %v1157
        %1182 = vmatprep.subr.mxu0 0.0
        %1183 = vmatpush1.msra.mxu0 %v1158
        %1184 = vmatprep.subr.mxu0 0.0
        %1185 = vmatpush1.msra.mxu0 %v1159
        %1186 = vmatprep.subr.mxu0 0.0
        %1187 = vmatpush1.msra.mxu0 %v1160
        %1188 = vmatprep.subr.mxu0 0.0
        %1189 = vmatpush1.msra.mxu0 %v1161
        %1190 = vmatprep.subr.mxu0 0.0
        %1191 = vmatpush1.msra.mxu0 %v1162
        %1192 = vmatprep.subr.mxu0 0.0
        %1193 = vmatpush1.msra.mxu0 %v1163
        %1194 = vmatprep.subr.mxu0 0.0
        %1195 = vmatpush1.msra.mxu0 %v1164
        %1196 = vmatprep.subr.mxu0 0.0
        %1197 = vmatpush1.msra.mxu0 %v1165
        %1198 = vmatprep.subr.mxu0 0.0
        %1199 = vmatpush1.msra.mxu0 0.0
        %1200 = vmatprep.subr.mxu0 0.0
        %1201 = vmatpush1.msra.mxu0 0.0
        %1202 = vmatprep.subr.mxu0 0.0
        %1203 = vmatpush1.msra.mxu0 0.0
        %1204 = vmatprep.subr.mxu0 0.0
        %1205 = vmatpush1.msra.mxu0 0.0
        %1206 = vmatprep.subr.mxu0 0.0
        %1207 = vmatpush1.msra.mxu0 0.0
        %1208 = vmatprep.subr.mxu0 0.0
        %1209 = vmatpush1.msra.mxu0 0.0
        %1210 = vmatprep.subr.mxu0 0.0
        %1211 = vmatpush1.msra.mxu0 0.0
        %1212 = vmatprep.subr.mxu0 0.0
        %1213 = vmatpush1.msra.mxu0 0.0
        %1214 = vmatprep.subr.mxu0 0.0
        %1215 = vmatpush1.msra.mxu0 0.0
        %1216 = vmatprep.subr.mxu0 0.0
        %1217 = vmatpush1.msra.mxu0 0.0
        %1218 = vmatprep.subr.mxu0 0.0
        %1219 = vmatpush1.msra.mxu0 0.0
        %1220 = vmatprep.subr.mxu0 0.0
        %1221 = vmatpush1.msra.mxu0 0.0
        %1222 = vmatprep.subr.mxu0 0.0
        %1223 = vmatpush1.msra.mxu0 0.0
        %1224 = vmatprep.subr.mxu0 0.0
        %1225 = vmatpush1.msra.mxu0 0.0
        %1226 = vmatprep.subr.mxu0 0.0
        %1227 = vmatpush1.msra.mxu0 0.0
        %1228 = vmatprep.subr.mxu0 0.0
        %1229 = vmatpush1.msra.mxu0 0.0
        %1230 = vmatprep.mubr.f32.mxu0 0.0
        %1231 = vmatmul.mubr.f32.gmra.mrb[0].mxu0 %v1133
        %v1232 = vpop.f32.mrb[0].mxu0
        %v1233 = vadd.f32 0.0, %v1232
        %v1234 = vpop.f32.mrb[0].mxu0
        %1235 = vdwg.mxu0
        %1236 = vmatprep.subr.mxu0 0.0
        %1237 = vmatpush1.msra.mxu0 %v1134
        %1238 = vmatprep.subr.mxu0 0.0
        %1239 = vmatpush1.msra.mxu0 %v1135
        %1240 = vmatprep.subr.mxu0 0.0
        %1241 = vmatpush1.msra.mxu0 %v1136
        %1242 = vmatprep.subr.mxu0 0.0
        %1243 = vmatpush1.msra.mxu0 %v1137
        %1244 = vmatprep.subr.mxu0 0.0
        %1245 = vmatpush1.msra.mxu0 %v1138
        %1246 = vmatprep.subr.mxu0 0.0
        %1247 = vmatpush1.msra.mxu0 %v1139
        %1248 = vmatprep.subr.mxu0 0.0
        %1249 = vmatpush1.msra.mxu0 %v1140
        %1250 = vmatprep.subr.mxu0 0.0
        %1251 = vmatpush1.msra.mxu0 %v1141
        %1252 = vmatprep.subr.mxu0 0.0
        %1253 = vmatpush1.msra.mxu0 %v1142
        %1254 = vmatprep.subr.mxu0 0.0
        %1255 = vmatpush1.msra.mxu0 %v1143
        %1256 = vmatprep.subr.mxu0 0.0
        %1257 = vmatpush1.msra.mxu0 %v1144
        %1258 = vmatprep.subr.mxu0 0.0
        %1259 = vmatpush1.msra.mxu0 %v1145
        %1260 = vmatprep.subr.mxu0 0.0
        %1261 = vmatpush1.msra.mxu0 %v1146
        %1262 = vmatprep.subr.mxu0 0.0
        %1263 = vmatpush1.msra.mxu0 %v1147
        %1264 = vmatprep.subr.mxu0 0.0
        %1265 = vmatpush1.msra.mxu0 %v1148
        %1266 = vmatprep.subr.mxu0 0.0
        %1267 = vmatpush1.msra.mxu0 %v1149
        %1268 = vmatprep.subr.mxu0 0.0
        %1269 = vmatpush1.msra.mxu0 0.0
        %1270 = vmatprep.subr.mxu0 0.0
        %1271 = vmatpush1.msra.mxu0 0.0
        %1272 = vmatprep.subr.mxu0 0.0
        %1273 = vmatpush1.msra.mxu0 0.0
        %1274 = vmatprep.subr.mxu0 0.0
        %1275 = vmatpush1.msra.mxu0 0.0
        %1276 = vmatprep.subr.mxu0 0.0
        %1277 = vmatpush1.msra.mxu0 0.0
        %1278 = vmatprep.subr.mxu0 0.0
        %1279 = vmatpush1.msra.mxu0 0.0
        %1280 = vmatprep.subr.mxu0 0.0
        %1281 = vmatpush1.msra.mxu0 0.0
        %1282 = vmatprep.subr.mxu0 0.0
        %1283 = vmatpush1.msra.mxu0 0.0
        %1284 = vmatprep.subr.mxu0 0.0
        %1285 = vmatpush1.msra.mxu0 0.0
        %1286 = vmatprep.subr.mxu0 0.0
        %1287 = vmatpush1.msra.mxu0 0.0
        %1288 = vmatprep.subr.mxu0 0.0
        %1289 = vmatpush1.msra.mxu0 0.0
        %1290 = vmatprep.subr.mxu0 0.0
        %1291 = vmatpush1.msra.mxu0 0.0
        %1292 = vmatprep.subr.mxu0 0.0
        %1293 = vmatpush1.msra.mxu0 0.0
        %1294 = vmatprep.subr.mxu0 0.0
        %1295 = vmatpush1.msra.mxu0 0.0
        %1296 = vmatprep.subr.mxu0 0.0
        %1297 = vmatpush1.msra.mxu0 0.0
        %1298 = vmatprep.subr.mxu0 0.0
        %1299 = vmatpush1.msra.mxu0 0.0
        %1300 = vmatprep.mubr.f32.mxu0 0.0
        %1301 = vmatmul.mubr.f32.gmra.mrb[0].mxu0 %v754
        %v1302 = vpop.f32.mrb[0].mxu0
        %v1303 = vadd.f32 %v1233, %v1302
        %v1304 = vpop.f32.mrb[0].mxu0
        %1305 = vdwg.mxu0
        %v1306 = vld [vmem:[%s12] sm:$0x1]
        %v1308 = vlaneseq
        %v1309 = vshrl.u32 %v1308, 7
        %v1310 = vsub.s32 0, %v1309
        %v1311 = vrot.slane %v1306, %v1310
        %v1313 = vadd.f32 %v1303, %v1311
        %v1314 = vmax.f32 %v1313, 0.0
        %v1315 = vld [vmem:[%s13] sm:$0x1]
        %v1317 = vlaneseq
        %v1318 = vshrl.u32 %v1317, 7
        %v1319 = vsub.s32 0, %v1318
        %v1320 = vrot.slane %v1315, %v1319
        %v1322 = vmul.f32 %v1314, %v1320
        %1323 = vadd.xlane.f32.xlu0 %v1322
        %v1324 = vpop.xlane.xlu0 %1323
        %v1325 = vld [vmem:[#allocation9] sm:$0x1]
        %v1327 = vlaneseq
        %v1328 = vshrl.u32 %v1327, 7
        %v1329 = vsub.s32 0, %v1328
        %v1330 = vrot.slane %v1325, %v1329
        %v1332 = vadd.f32 %v1324, %v1330
        %v1333 = vxor.u32 %v1332, 2147483648
        %v1334 = vmul.f32 %v1333, 1.442695
        %v1335 = vpow.pop %v1334
        %v1336 = vadd.f32 %v1335, 1.0
        %v1337 = vrcp.pop %v1336
        %v1338 = vmul.f32 1.0, %v1337
        %vm1339 = vcmask 7168
        %1340 = vst.msk [vmem:[%s505] sm:$0xff] %vm1339, %v1338
        %p1341 = scmp.lt.s32.totalorder %s41, 1
        %s1342 = scalar_select %p1341, %s41, 1
        %s1343 = smul.addr %s1342, 8
        %s1344 = scalar_lea.vmem %s15, %s1343
        // Predicated region
        $region93: #{tpu_custom_call.1} parent=71 // pred_check
          %p1345 = pneg %p332
        $region94: #{tpu_custom_call.1} parent=71 // pred_check_branch
          %1347 = sbr.rel (%p1345) target = $region96
        $region95: #{tpu_custom_call.1} parent=71 // pred_region
          _
        $region96: #{tpu_custom_call.1} parent=71 // pred_fallthru
          _
      $region72: #{tpu_custom_call.1} parent=5 // pred_fallthru
        _
      %p1348 = scmp.le.s32.totalorder 2, %s36
      // Predicated region
      $region97: #{tpu_custom_call.1} parent=5 // pred_check
        %p1349 = pneg %p1348
      $region98: #{tpu_custom_call.1} parent=5 // pred_check_branch
        %1351 = sbr.rel (%p1349) target = $region100
      $region99: #{tpu_custom_call.1} parent=5 // pred_region
        %s1352 = ssub.s32 %s36, 2
        // Predicated region
        $region101: #{tpu_custom_call.1} parent=99 // pred_check
          %p1353 = pneg %p338
        $region102: #{tpu_custom_call.1} parent=99 // pred_check_branch
          %1355 = sbr.rel (%p1353) target = $region104
        $region103: #{tpu_custom_call.1} parent=99 // pred_region
          %p1356 = scmp.lt.s32.totalorder %s42, 1
          %s1357 = scalar_select %p1356, %s42, 1
          %s1358 = smul.addr %s1357, 8
          %s1359 = scalar_lea.vmem %s15, %s1358
        $region104: #{tpu_custom_call.1} parent=99 // pred_fallthru
          _
      $region100: #{tpu_custom_call.1} parent=5 // pred_fallthru
        _
    $region6: #{tpu_custom_call.1} parent=1 // loop_footer
      %s40 = sadd.s32 1, %s36
    $region7: #{tpu_custom_call.1} parent=1 // loop_footer_branch
      %35 = sbr.rel target = $region3
    $region8: #{tpu_custom_call.1} parent=1 // loop_exit
      _
    %1360 = vsyncpa [#allocation11], 1
    %s1361 = scalar_lea.sflag [#allocation11], 1
    %1362 = vsyncpa %s1361, 1
    %1363 = vsyncpa [#allocation13], 1
    %1364 = vsyncpa [#allocation16], 1

</llo_original>
